<compile_context>
chip_gen: v7x
topology: tpu7x:2x2x1
jax: 0.10.0
libtpu: 0.0.40
codegen_flags: <defaults>
</compile_context>

<pallas_src>
import jax
import jax.numpy as jnp
from jax import lax
from jax.experimental import pallas as pl
from jax.experimental.pallas import tpu as pltpu
import numpy as np

# ---------------- configuration consistent with the module ----------------
B = 4                  # batch
C_IN = 3               # Minigrid observation channels
H = W = 8              # spatial size of the "full" observation
CH = (16, 32, 32)      # conv out channels
MLP_HIDDEN = 256       # create_mlp intermediate size
N_AUT_STATES = 16      # num_automaton_states (one-hot width)
N_ACTIONS = 7

HO1, WO1 = H - 1, W - 1
HO2, WO2 = HO1 - 1, WO1 - 1
HO3, WO3 = HO2 - 1, WO2 - 1
EMB = HO3 * WO3 * CH[2]          # MinigridConv.embedding_size = 5*5*32 = 800
R = H * B                        # activation rows (h, b) = 32
FEAT_CONV = HO3 * W * CH[2]      # 5 * 8 * 32 = 1280 (includes zero-weighted pad cols)


# ----------------------------- fused kernel --------------------------------
def crm_dqn_kernel(x_ref, aut_ref, shift_ref,
                   w1a_ref, w1b_ref, b1_ref,
                   w2a_ref, w2b_ref, b2_ref,
                   w3a_ref, w3b_ref, b3_ref,
                   wm1c_ref, wm1a_ref, bm1_ref, wm2_ref, bm2_ref,
                   q_ref):
    f32 = jnp.float32
    shift = shift_ref[...]                       # (R, R): row r -> row r + B (next image row)

    def conv_layer(x, wa, wb, brow):
        # y[(ho,b), (wo,co)] = relu( sum_{kh,kw,ci} x[(ho+kh,b),(wo+kw,ci)] * W[co,ci,kh,kw] + b[co] )
        x_dn = jnp.dot(shift, x, preferred_element_type=f32)          # rows shifted down one image row
        y = (jnp.dot(x, wa, preferred_element_type=f32)
             + jnp.dot(x_dn, wb, preferred_element_type=f32)
             + brow)
        return jnp.maximum(y, 0.0)

    y = conv_layer(x_ref[...], w1a_ref[...], w1b_ref[...], b1_ref[...])   # (R, W*16) = (32, 128)
    y = conv_layer(y,          w2a_ref[...], w2b_ref[...], b2_ref[...])   # (R, W*32) = (32, 256)
    y = conv_layer(y,          w3a_ref[...], w3b_ref[...], b3_ref[...])   # (R, W*32) = (32, 256)

    # Gather the B rows of each valid output height ho into a lane-dense (B, 1280) feature slab.
    feat = jnp.concatenate([y[ho * B:(ho + 1) * B, :] for ho in range(HO3)], axis=1)

    h = jnp.maximum(
        jnp.dot(feat, wm1c_ref[...], preferred_element_type=f32)
        + jnp.dot(aut_ref[...], wm1a_ref[...], preferred_element_type=f32)
        + bm1_ref[...], 0.0)                                              # (B, 256)

    q_ref[...] = (jnp.dot(h, wm2_ref[...], preferred_element_type=f32)
                  + bm2_ref[...])                                          # (B, N_ACTIONS)


def run_fused(x2d, aut, kp):
    vmem = pl.BlockSpec(memory_space=pltpu.MemorySpace.VMEM)
    return pl.pallas_call(
        crm_dqn_kernel,
        out_shape=jax.ShapeDtypeStruct((B, N_ACTIONS), jnp.float32),
        in_specs=[vmem] * 17,
        out_specs=vmem,
    )(x2d, aut, kp["shift"],
      kp["w1a"], kp["w1b"], kp["b1"],
      kp["w2a"], kp["w2b"], kp["b2"],
      kp["w3a"], kp["w3b"], kp["b3"],
      kp["wm1c"], kp["wm1a"], kp["bm1"], kp["wm2"], kp["bm2"])


# -------------------- one-time parameter preparation -----------------------
def prepare_params(p):
    """Repack PyTorch-layout parameters into kernel layout. Run ONCE, outside the
    per-call path (hoisted per the performance guidance)."""

    def block_conv_weight(wt, bias):
        # wt: PyTorch Conv2d weight (Cout, Cin, kh, kw). Build, per kh tap, a
        # (W*Cin, W*Cout) block matrix mapping (wi, ci) -> (wo, co) with wi = wo + kw.
        wt = np.asarray(wt, np.float32)
        cout, cin = wt.shape[0], wt.shape[1]
        bw = np.zeros((2, W * cin, W * cout), np.float32)
        for kh in range(2):
            for kw in range(2):
                tap = wt[:, :, kh, kw].T                   # (Cin, Cout)
                for wo in range(W - 1):                    # last output block col stays invalid/zero
                    wi = wo + kw
                    bw[kh, wi * cin:(wi + 1) * cin, wo * cout:(wo + 1) * cout] = tap
        brow = np.tile(np.asarray(bias, np.float32), W)[None, :]   # (1, W*Cout)
        return jnp.asarray(bw[0]), jnp.asarray(bw[1]), jnp.asarray(brow)

    w1a, w1b, b1 = block_conv_weight(p["conv1_w"], p["conv1_b"])
    w2a, w2b, b2 = block_conv_weight(p["conv2_w"], p["conv2_b"])
    w3a, w3b, b3 = block_conv_weight(p["conv3_w"], p["conv3_b"])

    # Row-shift matrix: (S @ X)[r] = X[r + B]; rows >= R - B become zero (invalid heights).
    shift = np.zeros((R, R), np.float32)
    shift[np.arange(R - B), np.arange(B, R)] = 1.0

    # MLP layer 1: permute the conv columns from PyTorch flatten order (c, h, w) to the
    # kernel feature order (ho, wo, co) with wo padded to W (zero rows for wo >= WO3).
    w1 = np.asarray(p["mlp1_w"], np.float32)                     # (256, EMB + N_AUT_STATES)
    w1c = w1[:, :EMB].reshape(MLP_HIDDEN, CH[2], HO3, WO3)       # (j, co, ho, wo)
    wm1c = np.zeros((HO3, W, CH[2], MLP_HIDDEN), np.float32)
    wm1c[:, :WO3, :, :] = np.transpose(w1c, (2, 3, 1, 0))        # (ho, wo, co, j)
    wm1c = wm1c.reshape(FEAT_CONV, MLP_HIDDEN)                   # (1280, 256)
    wm1a = w1[:, EMB:].T                                         # (N_AUT_STATES, 256)

    return {
        "shift": jnp.asarray(shift),
        "w1a": w1a, "w1b": w1b, "b1": b1,
        "w2a": w2a, "w2b": w2b, "b2": b2,
        "w3a": w3a, "w3b": w3b, "b3": b3,
        "wm1c": jnp.asarray(wm1c),
        "wm1a": jnp.asarray(wm1a),
        "bm1": jnp.asarray(np.asarray(p["mlp1_b"], np.float32))[None, :],
        "wm2": jnp.asarray(np.asarray(p["mlp2_w"], np.float32).T),      # (256, N_ACTIONS)
        "bm2": jnp.asarray(np.asarray(p["mlp2_b"], np.float32))[None, :],
    }


# ------------------------------- forward ------------------------------------
def minigrid_crm_dqn_forward(obs_nchw, automaton_state_embedding, kp):
    # NCHW -> rows=(h, b), lanes=(w, c): tiny per-call layout op (3 KiB), fused by XLA.
    x2d = jnp.transpose(obs_nchw, (2, 0, 3, 1)).reshape(H * B, W * C_IN)
    return run_fused(x2d, automaton_state_embedding, kp)


# -------------------------- pure-JAX reference ------------------------------
def reference_forward(obs_nchw, automaton_state_embedding, p):
    x = obs_nchw
    for wname, bname in (("conv1_w", "conv1_b"), ("conv2_w", "conv2_b"),
                         ("conv3_w", "conv3_b")):
        x = lax.conv_general_dilated(
            x, p[wname], (1, 1), "VALID",
            dimension_numbers=("NCHW", "OIHW", "NCHW"),
            precision=lax.Precision.HIGHEST)
        x = jnp.maximum(x + p[bname][None, :, None, None], 0.0)
    conv_flat = x.reshape(x.shape[0], -1)                        # PyTorch flatten(1, -1)
    z = jnp.concatenate([conv_flat, automaton_state_embedding], axis=1)
    h = jnp.maximum(jnp.dot(z, p["mlp1_w"].T, precision=lax.Precision.HIGHEST)
                    + p["mlp1_b"], 0.0)
    q = jnp.dot(h, p["mlp2_w"].T, precision=lax.Precision.HIGHEST) + p["mlp2_b"]
    return q


# ------------------------------ main ----------------------------------------
if __name__ == "__main__":
    key = jax.random.PRNGKey(0)
    ks = jax.random.split(key, 16)

    def uni(k, shape, scale):
        return jax.random.uniform(k, shape, jnp.float32, -scale, scale)

    def sq(n):
        return 1.0 / np.sqrt(n)

    params = {
        # conv weights in PyTorch convention (Cout, Cin, kh, kw)
        "conv1_w": uni(ks[0], (CH[0], C_IN, 2, 2), sq(C_IN * 4)),
        "conv1_b": uni(ks[1], (CH[0],), sq(C_IN * 4)),
        "conv2_w": uni(ks[2], (CH[1], CH[0], 2, 2), sq(CH[0] * 4)),
        "conv2_b": uni(ks[3], (CH[1],), sq(CH[0] * 4)),
        "conv3_w": uni(ks[4], (CH[2], CH[1], 2, 2), sq(CH[1] * 4)),
        "conv3_b": uni(ks[5], (CH[2],), sq(CH[1] * 4)),
        # MLP: Linear(EMB + num_automaton_states, 256) -> ReLU -> Linear(256, n_actions)
        "mlp1_w": uni(ks[6], (MLP_HIDDEN, EMB + N_AUT_STATES), sq(EMB + N_AUT_STATES)),
        "mlp1_b": uni(ks[7], (MLP_HIDDEN,), sq(EMB + N_AUT_STATES)),
        "mlp2_w": uni(ks[8], (N_ACTIONS, MLP_HIDDEN), sq(MLP_HIDDEN)),
        "mlp2_b": uni(ks[9], (N_ACTIONS,), sq(MLP_HIDDEN)),
    }

    obs = jax.random.uniform(ks[10], (B, C_IN, H, W), jnp.float32, 0.0, 5.0)
    aut_idx = jax.random.randint(ks[11], (B,), 0, N_AUT_STATES)
    automaton_state_embedding = jax.nn.one_hot(aut_idx, N_AUT_STATES, dtype=jnp.float32)

    kparams = prepare_params(params)          # one-time weight repacking (hoisted)

    fwd = jax.jit(minigrid_crm_dqn_forward)
    q = fwd(obs, automaton_state_embedding, kparams)
    jax.block_until_ready(q)

    q_ref = reference_forward(obs, automaton_state_embedding, params)
    np.testing.assert_allclose(np.asarray(q), np.asarray(q_ref), rtol=2e-3, atol=2e-3)

    print("KERNEL_OK")
</pallas_src>

<mosaic_0001>
module attributes {stable_mosaic.version = 11 : i64} {
  func.func @crm_dqn_kernel(%arg0: memref<32x24xf32, #tpu.memory_space<vmem>>, %arg1: memref<4x16xf32, #tpu.memory_space<vmem>>, %arg2: memref<32x32xf32, #tpu.memory_space<vmem>>, %arg3: memref<24x128xf32, #tpu.memory_space<vmem>>, %arg4: memref<24x128xf32, #tpu.memory_space<vmem>>, %arg5: memref<1x128xf32, #tpu.memory_space<vmem>>, %arg6: memref<128x256xf32, #tpu.memory_space<vmem>>, %arg7: memref<128x256xf32, #tpu.memory_space<vmem>>, %arg8: memref<1x256xf32, #tpu.memory_space<vmem>>, %arg9: memref<256x256xf32, #tpu.memory_space<vmem>>, %arg10: memref<256x256xf32, #tpu.memory_space<vmem>>, %arg11: memref<1x256xf32, #tpu.memory_space<vmem>>, %arg12: memref<1280x256xf32, #tpu.memory_space<vmem>>, %arg13: memref<16x256xf32, #tpu.memory_space<vmem>>, %arg14: memref<1x256xf32, #tpu.memory_space<vmem>>, %arg15: memref<256x7xf32, #tpu.memory_space<vmem>>, %arg16: memref<1x7xf32, #tpu.memory_space<vmem>>, %arg17: memref<4x7xf32, #tpu.memory_space<vmem>>) attributes {dimension_semantics = [], scalar_prefetch = 0 : i64, scratch_operands = 0 : i64, tpu.core_type = #tpu.core_type<tc>} {
    %c0 = arith.constant 0 : index
    %c0_0 = arith.constant 0 : index
    %0 = vector.load %arg2[%c0, %c0_0] : memref<32x32xf32, #tpu.memory_space<vmem>>, vector<32x32xf32>
    %c0_1 = arith.constant 0 : index
    %c0_2 = arith.constant 0 : index
    %1 = vector.load %arg0[%c0_1, %c0_2] : memref<32x24xf32, #tpu.memory_space<vmem>>, vector<32x24xf32>
    %c0_3 = arith.constant 0 : index
    %c0_4 = arith.constant 0 : index
    %2 = vector.load %arg3[%c0_3, %c0_4] : memref<24x128xf32, #tpu.memory_space<vmem>>, vector<24x128xf32>
    %c0_5 = arith.constant 0 : index
    %c0_6 = arith.constant 0 : index
    %3 = vector.load %arg4[%c0_5, %c0_6] : memref<24x128xf32, #tpu.memory_space<vmem>>, vector<24x128xf32>
    %c0_7 = arith.constant 0 : index
    %c0_8 = arith.constant 0 : index
    %4 = vector.load %arg5[%c0_7, %c0_8] : memref<1x128xf32, #tpu.memory_space<vmem>>, vector<1x128xf32>
    %cst = arith.constant dense<0.000000e+00> : vector<32x24xf32>
    %5 = tpu.matmul %0, %1, %cst {dimension_numbers = #tpu.dot_dimension_numbers<[1], [0], [0], [1], [0, 0, 1, 1], [], []>} : vector<32x32xf32>, vector<32x24xf32>, vector<32x24xf32> -> vector<32x24xf32>
    %cst_9 = arith.constant dense<0.000000e+00> : vector<32x128xf32>
    %6 = tpu.matmul %1, %2, %cst_9 {dimension_numbers = #tpu.dot_dimension_numbers<[1], [0], [0], [1], [0, 0, 1, 1], [], []>} : vector<32x24xf32>, vector<24x128xf32>, vector<32x128xf32> -> vector<32x128xf32>
    %cst_10 = arith.constant dense<0.000000e+00> : vector<32x128xf32>
    %7 = tpu.matmul %5, %3, %cst_10 {dimension_numbers = #tpu.dot_dimension_numbers<[1], [0], [0], [1], [0, 0, 1, 1], [], []>} : vector<32x24xf32>, vector<24x128xf32>, vector<32x128xf32> -> vector<32x128xf32>
    %8 = arith.addf %6, %7 : vector<32x128xf32>
    %9 = vector.broadcast %4 : vector<1x128xf32> to vector<32x128xf32>
    %10 = arith.addf %8, %9 : vector<32x128xf32>
    %cst_11 = arith.constant 0.000000e+00 : f32
    %11 = vector.broadcast %cst_11 : f32 to vector<32x128xf32>
    %12 = arith.maximumf %10, %11 : vector<32x128xf32>
    %c0_12 = arith.constant 0 : index
    %c0_13 = arith.constant 0 : index
    %13 = vector.load %arg6[%c0_12, %c0_13] : memref<128x256xf32, #tpu.memory_space<vmem>>, vector<128x256xf32>
    %c0_14 = arith.constant 0 : index
    %c0_15 = arith.constant 0 : index
    %14 = vector.load %arg7[%c0_14, %c0_15] : memref<128x256xf32, #tpu.memory_space<vmem>>, vector<128x256xf32>
    %c0_16 = arith.constant 0 : index
    %c0_17 = arith.constant 0 : index
    %15 = vector.load %arg8[%c0_16, %c0_17] : memref<1x256xf32, #tpu.memory_space<vmem>>, vector<1x256xf32>
    %cst_18 = arith.constant dense<0.000000e+00> : vector<32x128xf32>
    %16 = tpu.matmul %0, %12, %cst_18 {dimension_numbers = #tpu.dot_dimension_numbers<[1], [0], [0], [1], [0, 0, 1, 1], [], []>} : vector<32x32xf32>, vector<32x128xf32>, vector<32x128xf32> -> vector<32x128xf32>
    %cst_19 = arith.constant dense<0.000000e+00> : vector<32x256xf32>
    %17 = tpu.matmul %12, %13, %cst_19 {dimension_numbers = #tpu.dot_dimension_numbers<[1], [0], [0], [1], [0, 0, 1, 1], [], []>} : vector<32x128xf32>, vector<128x256xf32>, vector<32x256xf32> -> vector<32x256xf32>
    %cst_20 = arith.constant dense<0.000000e+00> : vector<32x256xf32>
    %18 = tpu.matmul %16, %14, %cst_20 {dimension_numbers = #tpu.dot_dimension_numbers<[1], [0], [0], [1], [0, 0, 1, 1], [], []>} : vector<32x128xf32>, vector<128x256xf32>, vector<32x256xf32> -> vector<32x256xf32>
    %19 = arith.addf %17, %18 : vector<32x256xf32>
    %20 = vector.broadcast %15 : vector<1x256xf32> to vector<32x256xf32>
    %21 = arith.addf %19, %20 : vector<32x256xf32>
    %cst_21 = arith.constant 0.000000e+00 : f32
    %22 = vector.broadcast %cst_21 : f32 to vector<32x256xf32>
    %23 = arith.maximumf %21, %22 : vector<32x256xf32>
    %c0_22 = arith.constant 0 : index
    %c0_23 = arith.constant 0 : index
    %24 = vector.load %arg9[%c0_22, %c0_23] : memref<256x256xf32, #tpu.memory_space<vmem>>, vector<256x256xf32>
    %c0_24 = arith.constant 0 : index
    %c0_25 = arith.constant 0 : index
    %25 = vector.load %arg10[%c0_24, %c0_25] : memref<256x256xf32, #tpu.memory_space<vmem>>, vector<256x256xf32>
    %c0_26 = arith.constant 0 : index
    %c0_27 = arith.constant 0 : index
    %26 = vector.load %arg11[%c0_26, %c0_27] : memref<1x256xf32, #tpu.memory_space<vmem>>, vector<1x256xf32>
    %cst_28 = arith.constant dense<0.000000e+00> : vector<32x256xf32>
    %27 = tpu.matmul %0, %23, %cst_28 {dimension_numbers = #tpu.dot_dimension_numbers<[1], [0], [0], [1], [0, 0, 1, 1], [], []>} : vector<32x32xf32>, vector<32x256xf32>, vector<32x256xf32> -> vector<32x256xf32>
    %cst_29 = arith.constant dense<0.000000e+00> : vector<32x256xf32>
    %28 = tpu.matmul %23, %24, %cst_29 {dimension_numbers = #tpu.dot_dimension_numbers<[1], [0], [0], [1], [0, 0, 1, 1], [], []>} : vector<32x256xf32>, vector<256x256xf32>, vector<32x256xf32> -> vector<32x256xf32>
    %cst_30 = arith.constant dense<0.000000e+00> : vector<32x256xf32>
    %29 = tpu.matmul %27, %25, %cst_30 {dimension_numbers = #tpu.dot_dimension_numbers<[1], [0], [0], [1], [0, 0, 1, 1], [], []>} : vector<32x256xf32>, vector<256x256xf32>, vector<32x256xf32> -> vector<32x256xf32>
    %30 = arith.addf %28, %29 : vector<32x256xf32>
    %31 = vector.broadcast %26 : vector<1x256xf32> to vector<32x256xf32>
    %32 = arith.addf %30, %31 : vector<32x256xf32>
    %cst_31 = arith.constant 0.000000e+00 : f32
    %33 = vector.broadcast %cst_31 : f32 to vector<32x256xf32>
    %34 = arith.maximumf %32, %33 : vector<32x256xf32>
    %35 = vector.extract_strided_slice %34 {offsets = [0, 0], sizes = [4, 256], strides = [1, 1]} : vector<32x256xf32> to vector<4x256xf32>
    %36 = vector.extract_strided_slice %34 {offsets = [4, 0], sizes = [4, 256], strides = [1, 1]} : vector<32x256xf32> to vector<4x256xf32>
    %37 = vector.extract_strided_slice %34 {offsets = [8, 0], sizes = [4, 256], strides = [1, 1]} : vector<32x256xf32> to vector<4x256xf32>
    %38 = vector.extract_strided_slice %34 {offsets = [12, 0], sizes = [4, 256], strides = [1, 1]} : vector<32x256xf32> to vector<4x256xf32>
    %39 = vector.extract_strided_slice %34 {offsets = [16, 0], sizes = [4, 256], strides = [1, 1]} : vector<32x256xf32> to vector<4x256xf32>
    %40 = tpu.concatenate %35, %36, %37, %38, %39 in 1 : vector<4x256xf32>, vector<4x256xf32>, vector<4x256xf32>, vector<4x256xf32>, vector<4x256xf32> -> vector<4x1280xf32>
    %c0_32 = arith.constant 0 : index
    %c0_33 = arith.constant 0 : index
    %41 = vector.load %arg12[%c0_32, %c0_33] : memref<1280x256xf32, #tpu.memory_space<vmem>>, vector<1280x256xf32>
    %cst_34 = arith.constant dense<0.000000e+00> : vector<4x256xf32>
    %42 = tpu.matmul %40, %41, %cst_34 {dimension_numbers = #tpu.dot_dimension_numbers<[1], [0], [0], [1], [0, 0, 1, 1], [], []>} : vector<4x1280xf32>, vector<1280x256xf32>, vector<4x256xf32> -> vector<4x256xf32>
    %c0_35 = arith.constant 0 : index
    %c0_36 = arith.constant 0 : index
    %43 = vector.load %arg1[%c0_35, %c0_36] : memref<4x16xf32, #tpu.memory_space<vmem>>, vector<4x16xf32>
    %c0_37 = arith.constant 0 : index
    %c0_38 = arith.constant 0 : index
    %44 = vector.load %arg13[%c0_37, %c0_38] : memref<16x256xf32, #tpu.memory_space<vmem>>, vector<16x256xf32>
    %cst_39 = arith.constant dense<0.000000e+00> : vector<4x256xf32>
    %45 = tpu.matmul %43, %44, %cst_39 {dimension_numbers = #tpu.dot_dimension_numbers<[1], [0], [0], [1], [0, 0, 1, 1], [], []>} : vector<4x16xf32>, vector<16x256xf32>, vector<4x256xf32> -> vector<4x256xf32>
    %46 = arith.addf %42, %45 : vector<4x256xf32>
    %c0_40 = arith.constant 0 : index
    %c0_41 = arith.constant 0 : index
    %47 = vector.load %arg14[%c0_40, %c0_41] : memref<1x256xf32, #tpu.memory_space<vmem>>, vector<1x256xf32>
    %48 = vector.broadcast %47 : vector<1x256xf32> to vector<4x256xf32>
    %49 = arith.addf %46, %48 : vector<4x256xf32>
    %cst_42 = arith.constant 0.000000e+00 : f32
    %50 = vector.broadcast %cst_42 : f32 to vector<4x256xf32>
    %51 = arith.maximumf %49, %50 : vector<4x256xf32>
    %c0_43 = arith.constant 0 : index
    %c0_44 = arith.constant 0 : index
    %52 = vector.load %arg15[%c0_43, %c0_44] : memref<256x7xf32, #tpu.memory_space<vmem>>, vector<256x7xf32>
    %cst_45 = arith.constant dense<0.000000e+00> : vector<4x7xf32>
    %53 = tpu.matmul %51, %52, %cst_45 {dimension_numbers = #tpu.dot_dimension_numbers<[1], [0], [0], [1], [0, 0, 1, 1], [], []>} : vector<4x256xf32>, vector<256x7xf32>, vector<4x7xf32> -> vector<4x7xf32>
    %c0_46 = arith.constant 0 : index
    %c0_47 = arith.constant 0 : index
    %54 = vector.load %arg16[%c0_46, %c0_47] : memref<1x7xf32, #tpu.memory_space<vmem>>, vector<1x7xf32>
    %55 = vector.broadcast %54 : vector<1x7xf32> to vector<4x7xf32>
    %56 = arith.addf %53, %55 : vector<4x7xf32>
    %c0_48 = arith.constant 0 : index
    %c0_49 = arith.constant 0 : index
    %57 = vector.load %arg17[%c0_48, %c0_49] : memref<4x7xf32, #tpu.memory_space<vmem>>, vector<4x7xf32>
    tpu.vector_store %arg17[%c0_48, %c0_49], %56 {strides = array<i32>} : memref<4x7xf32, #tpu.memory_space<vmem>>, vector<4x7xf32>,
    return
  }
}

</mosaic_0001>

<llo_original>
// kernel: minigrid_crm_dqn_forward.1
$region0: #{minigrid_crm_dqn_forward.1}
  #allocation0 [shape = 'u32[]', space=smem, size = 0x4, offset = 0x4, fixed_abs, tag = 'smem constant byte address 0x4 - core index']
  #allocation1 [shape = 'u32[144,128]{1,0:T(1,128)}', space=vmem, size = 0x12000, scoped, tag = 'internal scratch']
  %s0 = inlined_call_operand.vmem [shape: f32[32,24], index: 0, kind: input, shape index: {}]
  %s1 = inlined_call_operand.hbm [shape: f32[4,16], index: 1, kind: input, shape index: {}]
  %s2 = inlined_call_operand.hbm [shape: f32[32,32], index: 2, kind: input, shape index: {}]
  %s3 = inlined_call_operand.hbm [shape: f32[24,128], index: 3, kind: input, shape index: {}]
  %s4 = inlined_call_operand.hbm [shape: f32[24,128], index: 4, kind: input, shape index: {}]
  %s5 = inlined_call_operand.hbm [shape: f32[1,128], index: 5, kind: input, shape index: {}]
  %s6 = inlined_call_operand.hbm [shape: f32[128,256], index: 6, kind: input, shape index: {}]
  %s7 = inlined_call_operand.hbm [shape: f32[128,256], index: 7, kind: input, shape index: {}]
  %s8 = inlined_call_operand.hbm [shape: f32[1,256], index: 8, kind: input, shape index: {}]
  %s9 = inlined_call_operand.hbm [shape: f32[256,256], index: 9, kind: input, shape index: {}]
  %s10 = inlined_call_operand.hbm [shape: f32[256,256], index: 10, kind: input, shape index: {}]
  %s11 = inlined_call_operand.hbm [shape: f32[1,256], index: 11, kind: input, shape index: {}]
  %s12 = inlined_call_operand.hbm [shape: f32[1280,256], index: 12, kind: input, shape index: {}]
  %s13 = inlined_call_operand.hbm [shape: f32[16,256], index: 13, kind: input, shape index: {}]
  %s14 = inlined_call_operand.hbm [shape: f32[1,256], index: 14, kind: input, shape index: {}]
  %s15 = inlined_call_operand.vmem [shape: f32[256,7], index: 15, kind: input, shape index: {}]
  %s16 = inlined_call_operand.hbm [shape: f32[1,7], index: 16, kind: input, shape index: {}]
  %s17 = inlined_call_operand.hbm [shape: f32[4,7], index: 17, kind: output, shape index: {}]
  %s18 = sld [smem:[#allocation0]]
  $region138: #{minigrid_crm_dqn_forward.1} parent=0
    _
  %s20 = ssub.s32 1, %s18
  %s21 = scalar_select 0, %s20, %s18
  $region1: #{minigrid_crm_dqn_forward.1} parent=0
    #allocation2 [shape = 'u8[2048]{0}', space=vmem, size = 0x800, scoped, tag = 'input window, operand 1, single buffered']
    #allocation3 [shape = 's32[1]{0}', space=sflag, size = 0x4, scoped, tag = 'scoped memory for minigrid_crm_dqn_forward.1']
    #allocation4 [shape = 's32[1]{0}', space=sflag, size = 0x4, scoped, tag = 'scoped memory for minigrid_crm_dqn_forward.1']
    #allocation5 [shape = 'u8[16384]{0}', space=vmem, size = 0x4000, scoped, tag = 'input window, operand 2, single buffered']
    #allocation6 [shape = 's32[1]{0}', space=sflag, size = 0x4, scoped, tag = 'scoped memory for minigrid_crm_dqn_forward.1']
    #allocation7 [shape = 'u8[12288]{0}', space=vmem, size = 0x3000, scoped, tag = 'input window, operand 3, single buffered']
    #allocation8 [shape = 'u8[12288]{0}', space=vmem, size = 0x3000, scoped, tag = 'input window, operand 4, single buffered']
    #allocation9 [shape = 's32[1]{0}', space=sflag, size = 0x4, scoped, tag = 'scoped memory for minigrid_crm_dqn_forward.1']
    #allocation10 [shape = 'u8[512]{0}', space=vmem, size = 0x400, scoped, tag = 'input window, operand 5, single buffered']
    #allocation11 [shape = 'u8[131072]{0}', space=vmem, size = 0x20000, scoped, tag = 'input window, operand 6, single buffered']
    #allocation12 [shape = 's32[1]{0}', space=sflag, size = 0x4, scoped, tag = 'scoped memory for minigrid_crm_dqn_forward.1']
    #allocation13 [shape = 'u8[131072]{0}', space=vmem, size = 0x20000, scoped, tag = 'input window, operand 7, single buffered']
    #allocation14 [shape = 'u8[1024]{0}', space=vmem, size = 0x400, scoped, tag = 'input window, operand 8, single buffered']
    #allocation15 [shape = 's32[1]{0}', space=sflag, size = 0x4, scoped, tag = 'scoped memory for minigrid_crm_dqn_forward.1']
    #allocation16 [shape = 'u8[262144]{0}', space=vmem, size = 0x40000, scoped, tag = 'input window, operand 9, single buffered']
    #allocation17 [shape = 'u8[262144]{0}', space=vmem, size = 0x40000, scoped, tag = 'input window, operand 10, single buffered']
    #allocation18 [shape = 's32[1]{0}', space=sflag, size = 0x4, scoped, tag = 'scoped memory for minigrid_crm_dqn_forward.1']
    #allocation19 [shape = 'u8[1024]{0}', space=vmem, size = 0x400, scoped, tag = 'input window, operand 11, single buffered']
    #allocation20 [shape = 'u8[1310720]{0}', space=vmem, size = 0x140000, scoped, tag = 'input window, operand 12, single buffered']
    #allocation21 [shape = 's32[1]{0}', space=sflag, size = 0x4, scoped, tag = 'scoped memory for minigrid_crm_dqn_forward.1']
    #allocation22 [shape = 'u8[16384]{0}', space=vmem, size = 0x4000, scoped, tag = 'input window, operand 13, single buffered']
    #allocation23 [shape = 'u8[1024]{0}', space=vmem, size = 0x400, scoped, tag = 'input window, operand 14, single buffered']
    #allocation24 [shape = 's32[1]{0}', space=sflag, size = 0x4, scoped, tag = 'scoped memory for minigrid_crm_dqn_forward.1']
    #allocation25 [shape = 'u8[512]{0}', space=vmem, size = 0x400, scoped, tag = 'input window, operand 16, single buffered']
    #allocation26 [shape = 'u8[2048]{0}', space=vmem, size = 0x800, scoped, tag = 'output window, operand 0, single buffered']
    %22 = vsyncpa [#allocation3], 0
    %23 = vsyncpa [#allocation6], 0
    %24 = vsyncpa [#allocation9], 0
    %25 = vsyncpa [#allocation12], 0
    %26 = vsyncpa [#allocation15], 0
    %27 = vsyncpa [#allocation18], 0
    %28 = vsyncpa [#allocation21], 0
    %29 = vsyncpa [#allocation24], 0
    %30 = vsyncpa [#allocation4], 0
    // Predicated region
    $region2: #{minigrid_crm_dqn_forward.1} parent=1 // pred_check
      _
    $region3: #{minigrid_crm_dqn_forward.1} parent=1 // pred_check_branch
      %32 = sbr.rel (0) target = $region5
    $region4: #{minigrid_crm_dqn_forward.1} parent=1 // pred_region
      _
    $region5: #{minigrid_crm_dqn_forward.1} parent=1 // pred_fallthru
      _
    // Predicated region
    $region6: #{minigrid_crm_dqn_forward.1} parent=1 // pred_check
      _
    $region7: #{minigrid_crm_dqn_forward.1} parent=1 // pred_check_branch
      %34 = sbr.rel (0) target = $region9
    $region8: #{minigrid_crm_dqn_forward.1} parent=1 // pred_region
      %s36 = ssub.s32 64, 64
      %37 = vsyncadd [#allocation3], %s36
      %s39 = sshll.u32 [#allocation2], 4
      %s40 = int_to_ptr.vmem [resolvable:$true] %s39
      %42 = dma.hbm_to_vmem [thread:$0]  %s1, 64, %s40, [#allocation3]
    $region9: #{minigrid_crm_dqn_forward.1} parent=1 // pred_fallthru
      _
    // Predicated region
    $region10: #{minigrid_crm_dqn_forward.1} parent=1 // pred_check
      _
    $region11: #{minigrid_crm_dqn_forward.1} parent=1 // pred_check_branch
      %44 = sbr.rel (0) target = $region13
    $region12: #{minigrid_crm_dqn_forward.1} parent=1 // pred_region
      %s46 = ssub.s32 512, 512
      %47 = vsyncadd [#allocation6], %s46
      %s48 = sshll.u32 [#allocation5], 4
      %s49 = int_to_ptr.vmem [resolvable:$true] %s48
      %54 = dma.hbm_to_vmem [thread:$0]  %s2, 512, %s49, [#allocation6], 128, 128, 8
    $region13: #{minigrid_crm_dqn_forward.1} parent=1 // pred_fallthru
      _
    // Predicated region
    $region14: #{minigrid_crm_dqn_forward.1} parent=1 // pred_check
      _
    $region15: #{minigrid_crm_dqn_forward.1} parent=1 // pred_check_branch
      %56 = sbr.rel (0) target = $region17
    $region16: #{minigrid_crm_dqn_forward.1} parent=1 // pred_region
      %s58 = ssub.s32 384, 384
      %59 = vsyncadd [#allocation6], %s58
      %s60 = sshll.u32 [#allocation7], 4
      %s61 = int_to_ptr.vmem [resolvable:$true] %s60
      %66 = dma.hbm_to_vmem [thread:$0]  %s3, 384, %s61, [#allocation6], 128, 128, 8
    $region17: #{minigrid_crm_dqn_forward.1} parent=1 // pred_fallthru
      _
    // Predicated region
    $region18: #{minigrid_crm_dqn_forward.1} parent=1 // pred_check
      _
    $region19: #{minigrid_crm_dqn_forward.1} parent=1 // pred_check_branch
      %68 = sbr.rel (0) target = $region21
    $region20: #{minigrid_crm_dqn_forward.1} parent=1 // pred_region
      %s70 = ssub.s32 384, 384
      %71 = vsyncadd [#allocation9], %s70
      %s72 = sshll.u32 [#allocation8], 4
      %s73 = int_to_ptr.vmem [resolvable:$true] %s72
      %78 = dma.hbm_to_vmem [thread:$0]  %s4, 384, %s73, [#allocation9], 128, 128, 8
    $region21: #{minigrid_crm_dqn_forward.1} parent=1 // pred_fallthru
      _
    // Predicated region
    $region22: #{minigrid_crm_dqn_forward.1} parent=1 // pred_check
      _
    $region23: #{minigrid_crm_dqn_forward.1} parent=1 // pred_check_branch
      %80 = sbr.rel (0) target = $region25
    $region24: #{minigrid_crm_dqn_forward.1} parent=1 // pred_region
      %s82 = ssub.s32 16, 16
      %83 = vsyncadd [#allocation9], %s82
      %s85 = sshll.u32 [#allocation10], 4
      %s86 = int_to_ptr.vmem [resolvable:$true] %s85
      %88 = dma.hbm_to_vmem [thread:$0]  %s5, 16, %s86, [#allocation9]
    $region25: #{minigrid_crm_dqn_forward.1} parent=1 // pred_fallthru
      _
    // Predicated region
    $region26: #{minigrid_crm_dqn_forward.1} parent=1 // pred_check
      _
    $region27: #{minigrid_crm_dqn_forward.1} parent=1 // pred_check_branch
      %90 = sbr.rel (0) target = $region29
    $region28: #{minigrid_crm_dqn_forward.1} parent=1 // pred_region
      %s92 = ssub.s32 4096, 4096
      %93 = vsyncadd [#allocation12], %s92
      %s94 = sshll.u32 [#allocation11], 4
      %s95 = int_to_ptr.vmem [resolvable:$true] %s94
      %100 = dma.hbm_to_vmem [thread:$0]  %s6, 4096, %s95, [#allocation12], 256, 256, 16
    $region29: #{minigrid_crm_dqn_forward.1} parent=1 // pred_fallthru
      _
    // Predicated region
    $region30: #{minigrid_crm_dqn_forward.1} parent=1 // pred_check
      _
    $region31: #{minigrid_crm_dqn_forward.1} parent=1 // pred_check_branch
      %102 = sbr.rel (0) target = $region33
    $region32: #{minigrid_crm_dqn_forward.1} parent=1 // pred_region
      %s104 = ssub.s32 4096, 4096
      %105 = vsyncadd [#allocation12], %s104
      %s106 = sshll.u32 [#allocation13], 4
      %s107 = int_to_ptr.vmem [resolvable:$true] %s106
      %112 = dma.hbm_to_vmem [thread:$0]  %s7, 4096, %s107, [#allocation12], 256, 256, 16
    $region33: #{minigrid_crm_dqn_forward.1} parent=1 // pred_fallthru
      _
    // Predicated region
    $region34: #{minigrid_crm_dqn_forward.1} parent=1 // pred_check
      _
    $region35: #{minigrid_crm_dqn_forward.1} parent=1 // pred_check_branch
      %114 = sbr.rel (0) target = $region37
    $region36: #{minigrid_crm_dqn_forward.1} parent=1 // pred_region
      %s116 = ssub.s32 32, 32
      %117 = vsyncadd [#allocation15], %s116
      %s119 = sshll.u32 [#allocation14], 4
      %s120 = int_to_ptr.vmem [resolvable:$true] %s119
      %122 = dma.hbm_to_vmem [thread:$0]  %s8, 32, %s120, [#allocation15]
    $region37: #{minigrid_crm_dqn_forward.1} parent=1 // pred_fallthru
      _
    // Predicated region
    $region38: #{minigrid_crm_dqn_forward.1} parent=1 // pred_check
      _
    $region39: #{minigrid_crm_dqn_forward.1} parent=1 // pred_check_branch
      %124 = sbr.rel (0) target = $region41
    $region40: #{minigrid_crm_dqn_forward.1} parent=1 // pred_region
      %s126 = ssub.s32 8192, 8192
      %127 = vsyncadd [#allocation15], %s126
      %s128 = sshll.u32 [#allocation16], 4
      %s129 = int_to_ptr.vmem [resolvable:$true] %s128
      %134 = dma.hbm_to_vmem [thread:$0]  %s9, 8192, %s129, [#allocation15], 256, 256, 16
    $region41: #{minigrid_crm_dqn_forward.1} parent=1 // pred_fallthru
      _
    // Predicated region
    $region42: #{minigrid_crm_dqn_forward.1} parent=1 // pred_check
      _
    $region43: #{minigrid_crm_dqn_forward.1} parent=1 // pred_check_branch
      %136 = sbr.rel (0) target = $region45
    $region44: #{minigrid_crm_dqn_forward.1} parent=1 // pred_region
      %s138 = ssub.s32 8192, 8192
      %139 = vsyncadd [#allocation18], %s138
      %s140 = sshll.u32 [#allocation17], 4
      %s141 = int_to_ptr.vmem [resolvable:$true] %s140
      %146 = dma.hbm_to_vmem [thread:$0]  %s10, 8192, %s141, [#allocation18], 256, 256, 16
    $region45: #{minigrid_crm_dqn_forward.1} parent=1 // pred_fallthru
      _
    // Predicated region
    $region46: #{minigrid_crm_dqn_forward.1} parent=1 // pred_check
      _
    $region47: #{minigrid_crm_dqn_forward.1} parent=1 // pred_check_branch
      %148 = sbr.rel (0) target = $region49
    $region48: #{minigrid_crm_dqn_forward.1} parent=1 // pred_region
      %s150 = ssub.s32 32, 32
      %151 = vsyncadd [#allocation18], %s150
      %s153 = sshll.u32 [#allocation19], 4
      %s154 = int_to_ptr.vmem [resolvable:$true] %s153
      %156 = dma.hbm_to_vmem [thread:$0]  %s11, 32, %s154, [#allocation18]
    $region49: #{minigrid_crm_dqn_forward.1} parent=1 // pred_fallthru
      _
    // Predicated region
    $region50: #{minigrid_crm_dqn_forward.1} parent=1 // pred_check
      _
    $region51: #{minigrid_crm_dqn_forward.1} parent=1 // pred_check_branch
      %158 = sbr.rel (0) target = $region53
    $region52: #{minigrid_crm_dqn_forward.1} parent=1 // pred_region
      %s160 = ssub.s32 40960, 40960
      %161 = vsyncadd [#allocation21], %s160
      %s162 = sshll.u32 [#allocation20], 4
      %s163 = int_to_ptr.vmem [resolvable:$true] %s162
      %168 = dma.hbm_to_vmem [thread:$0]  %s12, 40960, %s163, [#allocation21], 256, 256, 16
    $region53: #{minigrid_crm_dqn_forward.1} parent=1 // pred_fallthru
      _
    // Predicated region
    $region54: #{minigrid_crm_dqn_forward.1} parent=1 // pred_check
      _
    $region55: #{minigrid_crm_dqn_forward.1} parent=1 // pred_check_branch
      %170 = sbr.rel (0) target = $region57
    $region56: #{minigrid_crm_dqn_forward.1} parent=1 // pred_region
      %s172 = ssub.s32 512, 512
      %173 = vsyncadd [#allocation21], %s172
      %s174 = sshll.u32 [#allocation22], 4
      %s175 = int_to_ptr.vmem [resolvable:$true] %s174
      %180 = dma.hbm_to_vmem [thread:$0]  %s13, 512, %s175, [#allocation21], 256, 256, 16
    $region57: #{minigrid_crm_dqn_forward.1} parent=1 // pred_fallthru
      _
    // Predicated region
    $region58: #{minigrid_crm_dqn_forward.1} parent=1 // pred_check
      _
    $region59: #{minigrid_crm_dqn_forward.1} parent=1 // pred_check_branch
      %182 = sbr.rel (0) target = $region61
    $region60: #{minigrid_crm_dqn_forward.1} parent=1 // pred_region
      %s184 = ssub.s32 32, 32
      %185 = vsyncadd [#allocation24], %s184
      %s187 = sshll.u32 [#allocation23], 4
      %s188 = int_to_ptr.vmem [resolvable:$true] %s187
      %190 = dma.hbm_to_vmem [thread:$0]  %s14, 32, %s188, [#allocation24]
    $region61: #{minigrid_crm_dqn_forward.1} parent=1 // pred_fallthru
      _
    // Predicated region
    $region62: #{minigrid_crm_dqn_forward.1} parent=1 // pred_check
      _
    $region63: #{minigrid_crm_dqn_forward.1} parent=1 // pred_check_branch
      %192 = sbr.rel (0) target = $region65
    $region64: #{minigrid_crm_dqn_forward.1} parent=1 // pred_region
      _
    $region65: #{minigrid_crm_dqn_forward.1} parent=1 // pred_fallthru
      _
    // Predicated region
    $region66: #{minigrid_crm_dqn_forward.1} parent=1 // pred_check
      _
    $region67: #{minigrid_crm_dqn_forward.1} parent=1 // pred_check_branch
      %194 = sbr.rel (0) target = $region69
    $region68: #{minigrid_crm_dqn_forward.1} parent=1 // pred_region
      %s196 = ssub.s32 16, 16
      %197 = vsyncadd [#allocation24], %s196
      %s199 = sshll.u32 [#allocation25], 4
      %s200 = int_to_ptr.vmem [resolvable:$true] %s199
      %202 = dma.hbm_to_vmem [thread:$0]  %s16, 16, %s200, [#allocation24]
    $region69: #{minigrid_crm_dqn_forward.1} parent=1 // pred_fallthru
      _
    // Predicated region
    $region70: #{minigrid_crm_dqn_forward.1} parent=1 // pred_check
      _
    $region71: #{minigrid_crm_dqn_forward.1} parent=1 // pred_check_branch
      %204 = sbr.rel (0) target = $region73
    $region72: #{minigrid_crm_dqn_forward.1} parent=1 // pred_region
      %205 = dma.done [#allocation3], 64
    $region73: #{minigrid_crm_dqn_forward.1} parent=1 // pred_fallthru
      _
    // Predicated region
    $region74: #{minigrid_crm_dqn_forward.1} parent=1 // pred_check
      _
    $region75: #{minigrid_crm_dqn_forward.1} parent=1 // pred_check_branch
      %207 = sbr.rel (0) target = $region77
    $region76: #{minigrid_crm_dqn_forward.1} parent=1 // pred_region
      %208 = dma.done [#allocation6], 512
    $region77: #{minigrid_crm_dqn_forward.1} parent=1 // pred_fallthru
      _
    // Predicated region
    $region78: #{minigrid_crm_dqn_forward.1} parent=1 // pred_check
      _
    $region79: #{minigrid_crm_dqn_forward.1} parent=1 // pred_check_branch
      %210 = sbr.rel (0) target = $region81
    $region80: #{minigrid_crm_dqn_forward.1} parent=1 // pred_region
      %211 = dma.done [#allocation6], 384
    $region81: #{minigrid_crm_dqn_forward.1} parent=1 // pred_fallthru
      _
    // Predicated region
    $region82: #{minigrid_crm_dqn_forward.1} parent=1 // pred_check
      _
    $region83: #{minigrid_crm_dqn_forward.1} parent=1 // pred_check_branch
      %213 = sbr.rel (0) target = $region85
    $region84: #{minigrid_crm_dqn_forward.1} parent=1 // pred_region
      %214 = dma.done [#allocation9], 384
    $region85: #{minigrid_crm_dqn_forward.1} parent=1 // pred_fallthru
      _
    // Predicated region
    $region86: #{minigrid_crm_dqn_forward.1} parent=1 // pred_check
      _
    $region87: #{minigrid_crm_dqn_forward.1} parent=1 // pred_check_branch
      %216 = sbr.rel (0) target = $region89
    $region88: #{minigrid_crm_dqn_forward.1} parent=1 // pred_region
      %217 = dma.done [#allocation9], 16
    $region89: #{minigrid_crm_dqn_forward.1} parent=1 // pred_fallthru
      _
    // Predicated region
    $region90: #{minigrid_crm_dqn_forward.1} parent=1 // pred_check
      _
    $region91: #{minigrid_crm_dqn_forward.1} parent=1 // pred_check_branch
      %219 = sbr.rel (0) target = $region93
    $region92: #{minigrid_crm_dqn_forward.1} parent=1 // pred_region
      %220 = dma.done [#allocation12], 4096
    $region93: #{minigrid_crm_dqn_forward.1} parent=1 // pred_fallthru
      _
    // Predicated region
    $region94: #{minigrid_crm_dqn_forward.1} parent=1 // pred_check
      _
    $region95: #{minigrid_crm_dqn_forward.1} parent=1 // pred_check_branch
      %222 = sbr.rel (0) target = $region97
    $region96: #{minigrid_crm_dqn_forward.1} parent=1 // pred_region
      %223 = dma.done [#allocation12], 4096
    $region97: #{minigrid_crm_dqn_forward.1} parent=1 // pred_fallthru
      _
    // Predicated region
    $region98: #{minigrid_crm_dqn_forward.1} parent=1 // pred_check
      _
    $region99: #{minigrid_crm_dqn_forward.1} parent=1 // pred_check_branch
      %225 = sbr.rel (0) target = $region101
    $region100: #{minigrid_crm_dqn_forward.1} parent=1 // pred_region
      %226 = dma.done [#allocation15], 32
    $region101: #{minigrid_crm_dqn_forward.1} parent=1 // pred_fallthru
      _
    // Predicated region
    $region102: #{minigrid_crm_dqn_forward.1} parent=1 // pred_check
      _
    $region103: #{minigrid_crm_dqn_forward.1} parent=1 // pred_check_branch
      %228 = sbr.rel (0) target = $region105
    $region104: #{minigrid_crm_dqn_forward.1} parent=1 // pred_region
      %229 = dma.done [#allocation15], 8192
    $region105: #{minigrid_crm_dqn_forward.1} parent=1 // pred_fallthru
      _
    // Predicated region
    $region106: #{minigrid_crm_dqn_forward.1} parent=1 // pred_check
      _
    $region107: #{minigrid_crm_dqn_forward.1} parent=1 // pred_check_branch
      %231 = sbr.rel (0) target = $region109
    $region108: #{minigrid_crm_dqn_forward.1} parent=1 // pred_region
      %232 = dma.done [#allocation18], 8192
    $region109: #{minigrid_crm_dqn_forward.1} parent=1 // pred_fallthru
      _
    // Predicated region
    $region110: #{minigrid_crm_dqn_forward.1} parent=1 // pred_check
      _
    $region111: #{minigrid_crm_dqn_forward.1} parent=1 // pred_check_branch
      %234 = sbr.rel (0) target = $region113
    $region112: #{minigrid_crm_dqn_forward.1} parent=1 // pred_region
      %235 = dma.done [#allocation18], 32
    $region113: #{minigrid_crm_dqn_forward.1} parent=1 // pred_fallthru
      _
    // Predicated region
    $region114: #{minigrid_crm_dqn_forward.1} parent=1 // pred_check
      _
    $region115: #{minigrid_crm_dqn_forward.1} parent=1 // pred_check_branch
      %237 = sbr.rel (0) target = $region117
    $region116: #{minigrid_crm_dqn_forward.1} parent=1 // pred_region
      %238 = dma.done [#allocation21], 40960
    $region117: #{minigrid_crm_dqn_forward.1} parent=1 // pred_fallthru
      _
    // Predicated region
    $region118: #{minigrid_crm_dqn_forward.1} parent=1 // pred_check
      _
    $region119: #{minigrid_crm_dqn_forward.1} parent=1 // pred_check_branch
      %240 = sbr.rel (0) target = $region121
    $region120: #{minigrid_crm_dqn_forward.1} parent=1 // pred_region
      %241 = dma.done [#allocation21], 512
    $region121: #{minigrid_crm_dqn_forward.1} parent=1 // pred_fallthru
      _
    // Predicated region
    $region122: #{minigrid_crm_dqn_forward.1} parent=1 // pred_check
      _
    $region123: #{minigrid_crm_dqn_forward.1} parent=1 // pred_check_branch
      %243 = sbr.rel (0) target = $region125
    $region124: #{minigrid_crm_dqn_forward.1} parent=1 // pred_region
      %244 = dma.done [#allocation24], 32
    $region125: #{minigrid_crm_dqn_forward.1} parent=1 // pred_fallthru
      _
    // Predicated region
    $region126: #{minigrid_crm_dqn_forward.1} parent=1 // pred_check
      _
    $region127: #{minigrid_crm_dqn_forward.1} parent=1 // pred_check_branch
      %246 = sbr.rel (0) target = $region129
    $region128: #{minigrid_crm_dqn_forward.1} parent=1 // pred_region
      %247 = dma.done [#allocation24], 16
    $region129: #{minigrid_crm_dqn_forward.1} parent=1 // pred_fallthru
      _
    %v248 = vld [vmem:[#allocation5] sm:$0xff]
    %v249 = vld [vmem:[#allocation5 + $0x8] sm:$0xff]
    %v250 = vld [vmem:[#allocation5 + $0x10] sm:$0xff]
    %v251 = vld [vmem:[#allocation5 + $0x18] sm:$0xff]
    %v252 = vld [vmem:[%s0] sm:$0xff]
    %v253 = vld [vmem:[%s0 + $0x8] sm:$0xff]
    %v254 = vld [vmem:[%s0 + $0x10] sm:$0xff]
    %v255 = vld [vmem:[%s0 + $0x18] sm:$0xff]
    %v256 = vld [vmem:[#allocation7] sm:$0xff]
    %v257 = vld [vmem:[#allocation7 + $0x8] sm:$0xff]
    %v258 = vld [vmem:[#allocation7 + $0x10] sm:$0xff]
    %v259 = vld [vmem:[#allocation8] sm:$0xff]
    %v260 = vld [vmem:[#allocation8 + $0x8] sm:$0xff]
    %v261 = vld [vmem:[#allocation8 + $0x10] sm:$0xff]
    %v262 = vld [vmem:[#allocation10] sm:$0x1]
    %vm263 = vcmask 261120
    %v265 = vsel %vm263, %v248, 0
    %v268 = vsel %vm263, %v249, 0
    %v271 = vsel %vm263, %v250, 0
    %v274 = vsel %vm263, %v251, 0
    %276 = vmatprep.subr.mxu0 0.0
    %277 = vmatpush1.msra.mxu0 %v252
    %278 = vmatprep.subr.mxu0 0.0
    %279 = vmatpush1.msra.mxu0 %v253
    %280 = vmatprep.subr.mxu0 0.0
    %281 = vmatpush1.msra.mxu0 %v254
    %282 = vmatprep.subr.mxu0 0.0
    %283 = vmatpush1.msra.mxu0 %v255
    %284 = vmatprep.subr.mxu0 0.0
    %285 = vmatpush1.msra.mxu0 0.0
    %286 = vmatprep.subr.mxu0 0.0
    %287 = vmatpush1.msra.mxu0 0.0
    %288 = vmatprep.subr.mxu0 0.0
    %289 = vmatpush1.msra.mxu0 0.0
    %290 = vmatprep.subr.mxu0 0.0
    %291 = vmatpush1.msra.mxu0 0.0
    %292 = vmatprep.subr.mxu0 0.0
    %293 = vmatpush1.msra.mxu0 0.0
    %294 = vmatprep.subr.mxu0 0.0
    %295 = vmatpush1.msra.mxu0 0.0
    %296 = vmatprep.subr.mxu0 0.0
    %297 = vmatpush1.msra.mxu0 0.0
    %298 = vmatprep.subr.mxu0 0.0
    %299 = vmatpush1.msra.mxu0 0.0
    %300 = vmatprep.subr.mxu0 0.0
    %301 = vmatpush1.msra.mxu0 0.0
    %302 = vmatprep.subr.mxu0 0.0
    %303 = vmatpush1.msra.mxu0 0.0
    %304 = vmatprep.subr.mxu0 0.0
    %305 = vmatpush1.msra.mxu0 0.0
    %306 = vmatprep.subr.mxu0 0.0
    %307 = vmatpush1.msra.mxu0 0.0
    %308 = vmatprep.subr.mxu0 0.0
    %309 = vmatpush1.msra.mxu0 0.0
    %310 = vmatprep.subr.mxu0 0.0
    %311 = vmatpush1.msra.mxu0 0.0
    %312 = vmatprep.subr.mxu0 0.0
    %313 = vmatpush1.msra.mxu0 0.0
    %314 = vmatprep.subr.mxu0 0.0
    %315 = vmatpush1.msra.mxu0 0.0
    %316 = vmatprep.subr.mxu0 0.0
    %317 = vmatpush1.msra.mxu0 0.0
    %318 = vmatprep.subr.mxu0 0.0
    %319 = vmatpush1.msra.mxu0 0.0
    %320 = vmatprep.subr.mxu0 0.0
    %321 = vmatpush1.msra.mxu0 0.0
    %322 = vmatprep.subr.mxu0 0.0
    %323 = vmatpush1.msra.mxu0 0.0
    %324 = vmatprep.subr.mxu0 0.0
    %325 = vmatpush1.msra.mxu0 0.0
    %326 = vmatprep.subr.mxu0 0.0
    %327 = vmatpush1.msra.mxu0 0.0
    %328 = vmatprep.subr.mxu0 0.0
    %329 = vmatpush1.msra.mxu0 0.0
    %330 = vmatprep.subr.mxu0 0.0
    %331 = vmatpush1.msra.mxu0 0.0
    %332 = vmatprep.subr.mxu0 0.0
    %333 = vmatpush1.msra.mxu0 0.0
    %334 = vmatprep.subr.mxu0 0.0
    %335 = vmatpush1.msra.mxu0 0.0
    %336 = vmatprep.subr.mxu0 0.0
    %337 = vmatpush1.msra.mxu0 0.0
    %338 = vmatprep.subr.mxu0 0.0
    %339 = vmatpush1.msra.mxu0 0.0
    %340 = vmatprep.mubr.f32.mxu0 0.0
    %341 = vmatmul.mubr.f32.gmra.mrb[0].mxu0 %v265
    %v342 = vpop.f32.mrb[0].mxu0
    %v343 = vadd.f32 0.0, %v342
    %v344 = vpop.f32.mrb[0].mxu0
    %345 = vmatprep.mubr.f32.mxu0 0.0
    %346 = vmatmul.mubr.f32.gmra.mrb[0].mxu0 %v268
    %v347 = vpop.f32.mrb[0].mxu0
    %v348 = vadd.f32 0.0, %v347
    %v349 = vpop.f32.mrb[0].mxu0
    %350 = vmatprep.mubr.f32.mxu0 0.0
    %351 = vmatmul.mubr.f32.gmra.mrb[0].mxu0 %v271
    %v352 = vpop.f32.mrb[0].mxu0
    %v353 = vadd.f32 0.0, %v352
    %v354 = vpop.f32.mrb[0].mxu0
    %355 = vmatprep.mubr.f32.mxu0 0.0
    %356 = vmatmul.mubr.f32.gmra.mrb[0].mxu0 %v274
    %v357 = vpop.f32.mrb[0].mxu0
    %v358 = vadd.f32 0.0, %v357
    %v359 = vpop.f32.mrb[0].mxu0
    %360 = vdwg.mxu0
    %vm361 = vcmask 195584
    %v363 = vsel %vm361, %v343, 0
    %v366 = vsel %vm361, %v348, 0
    %v369 = vsel %vm361, %v353, 0
    %v372 = vsel %vm361, %v358, 0
    %374 = vmatprep.subr.mxu0 0.0
    %375 = vmatpush1.msra.mxu0 %v259
    %376 = vmatprep.subr.mxu0 0.0
    %377 = vmatpush1.msra.mxu0 %v260
    %378 = vmatprep.subr.mxu0 0.0
    %379 = vmatpush1.msra.mxu0 %v261
    %380 = vmatprep.subr.mxu0 0.0
    %381 = vmatpush1.msra.mxu0 0.0
    %382 = vmatprep.subr.mxu0 0.0
    %383 = vmatpush1.msra.mxu0 0.0
    %384 = vmatprep.subr.mxu0 0.0
    %385 = vmatpush1.msra.mxu0 0.0
    %386 = vmatprep.subr.mxu0 0.0
    %387 = vmatpush1.msra.mxu0 0.0
    %388 = vmatprep.subr.mxu0 0.0
    %389 = vmatpush1.msra.mxu0 0.0
    %390 = vmatprep.subr.mxu0 0.0
    %391 = vmatpush1.msra.mxu0 0.0
    %392 = vmatprep.subr.mxu0 0.0
    %393 = vmatpush1.msra.mxu0 0.0
    %394 = vmatprep.subr.mxu0 0.0
    %395 = vmatpush1.msra.mxu0 0.0
    %396 = vmatprep.subr.mxu0 0.0
    %397 = vmatpush1.msra.mxu0 0.0
    %398 = vmatprep.subr.mxu0 0.0
    %399 = vmatpush1.msra.mxu0 0.0
    %400 = vmatprep.subr.mxu0 0.0
    %401 = vmatpush1.msra.mxu0 0.0
    %402 = vmatprep.subr.mxu0 0.0
    %403 = vmatpush1.msra.mxu0 0.0
    %404 = vmatprep.subr.mxu0 0.0
    %405 = vmatpush1.msra.mxu0 0.0
    %406 = vmatprep.subr.mxu0 0.0
    %407 = vmatpush1.msra.mxu0 0.0
    %408 = vmatprep.subr.mxu0 0.0
    %409 = vmatpush1.msra.mxu0 0.0
    %410 = vmatprep.subr.mxu0 0.0
    %411 = vmatpush1.msra.mxu0 0.0
    %412 = vmatprep.subr.mxu0 0.0
    %413 = vmatpush1.msra.mxu0 0.0
    %414 = vmatprep.subr.mxu0 0.0
    %415 = vmatpush1.msra.mxu0 0.0
    %416 = vmatprep.subr.mxu0 0.0
    %417 = vmatpush1.msra.mxu0 0.0
    %418 = vmatprep.subr.mxu0 0.0
    %419 = vmatpush1.msra.mxu0 0.0
    %420 = vmatprep.subr.mxu0 0.0
    %421 = vmatpush1.msra.mxu0 0.0
    %422 = vmatprep.subr.mxu0 0.0
    %423 = vmatpush1.msra.mxu0 0.0
    %424 = vmatprep.subr.mxu0 0.0
    %425 = vmatpush1.msra.mxu0 0.0
    %426 = vmatprep.subr.mxu0 0.0
    %427 = vmatpush1.msra.mxu0 0.0
    %428 = vmatprep.subr.mxu0 0.0
    %429 = vmatpush1.msra.mxu0 0.0
    %430 = vmatprep.subr.mxu0 0.0
    %431 = vmatpush1.msra.mxu0 0.0
    %432 = vmatprep.subr.mxu0 0.0
    %433 = vmatpush1.msra.mxu0 0.0
    %434 = vmatprep.subr.mxu0 0.0
    %435 = vmatpush1.msra.mxu0 0.0
    %436 = vmatprep.subr.mxu0 0.0
    %437 = vmatpush1.msra.mxu0 0.0
    %438 = vmatprep.mubr.f32.mxu0 0.0
    %439 = vmatmul.mubr.f32.gmra.mrb[0].mxu0 %v363
    %v440 = vpop.f32.mrb[0].mxu0
    %v441 = vadd.f32 0.0, %v440
    %v442 = vpop.f32.mrb[0].mxu0
    %443 = vmatprep.mubr.f32.mxu0 0.0
    %444 = vmatmul.mubr.f32.gmra.mrb[0].mxu0 %v366
    %v445 = vpop.f32.mrb[0].mxu0
    %v446 = vadd.f32 0.0, %v445
    %v447 = vpop.f32.mrb[0].mxu0
    %448 = vmatprep.mubr.f32.mxu0 0.0
    %449 = vmatmul.mubr.f32.gmra.mrb[0].mxu0 %v369
    %v450 = vpop.f32.mrb[0].mxu0
    %v451 = vadd.f32 0.0, %v450
    %v452 = vpop.f32.mrb[0].mxu0
    %453 = vmatprep.mubr.f32.mxu0 0.0
    %454 = vmatmul.mubr.f32.gmra.mrb[0].mxu0 %v372
    %v455 = vpop.f32.mrb[0].mxu0
    %v456 = vadd.f32 0.0, %v455
    %v457 = vpop.f32.mrb[0].mxu0
    %458 = vdwg.mxu0
    %v460 = vsel %vm361, %v252, 0
    %v463 = vsel %vm361, %v253, 0
    %v466 = vsel %vm361, %v254, 0
    %v469 = vsel %vm361, %v255, 0
    %471 = vmatprep.subr.mxu0 0.0
    %472 = vmatpush1.msra.mxu0 %v256
    %473 = vmatprep.subr.mxu0 0.0
    %474 = vmatpush1.msra.mxu0 %v257
    %475 = vmatprep.subr.mxu0 0.0
    %476 = vmatpush1.msra.mxu0 %v258
    %477 = vmatprep.subr.mxu0 0.0
    %478 = vmatpush1.msra.mxu0 0.0
    %479 = vmatprep.subr.mxu0 0.0
    %480 = vmatpush1.msra.mxu0 0.0
    %481 = vmatprep.subr.mxu0 0.0
    %482 = vmatpush1.msra.mxu0 0.0
    %483 = vmatprep.subr.mxu0 0.0
    %484 = vmatpush1.msra.mxu0 0.0
    %485 = vmatprep.subr.mxu0 0.0
    %486 = vmatpush1.msra.mxu0 0.0
    %487 = vmatprep.subr.mxu0 0.0
    %488 = vmatpush1.msra.mxu0 0.0
    %489 = vmatprep.subr.mxu0 0.0
    %490 = vmatpush1.msra.mxu0 0.0
    %491 = vmatprep.subr.mxu0 0.0
    %492 = vmatpush1.msra.mxu0 0.0
    %493 = vmatprep.subr.mxu0 0.0
    %494 = vmatpush1.msra.mxu0 0.0
    %495 = vmatprep.subr.mxu0 0.0
    %496 = vmatpush1.msra.mxu0 0.0
    %497 = vmatprep.subr.mxu0 0.0
    %498 = vmatpush1.msra.mxu0 0.0
    %499 = vmatprep.subr.mxu0 0.0
    %500 = vmatpush1.msra.mxu0 0.0
    %501 = vmatprep.subr.mxu0 0.0
    %502 = vmatpush1.msra.mxu0 0.0
    %503 = vmatprep.subr.mxu0 0.0
    %504 = vmatpush1.msra.mxu0 0.0
    %505 = vmatprep.subr.mxu0 0.0
    %506 = vmatpush1.msra.mxu0 0.0
    %507 = vmatprep.subr.mxu0 0.0
    %508 = vmatpush1.msra.mxu0 0.0
    %509 = vmatprep.subr.mxu0 0.0
    %510 = vmatpush1.msra.mxu0 0.0
    %511 = vmatprep.subr.mxu0 0.0
    %512 = vmatpush1.msra.mxu0 0.0
    %513 = vmatprep.subr.mxu0 0.0
    %514 = vmatpush1.msra.mxu0 0.0
    %515 = vmatprep.subr.mxu0 0.0
    %516 = vmatpush1.msra.mxu0 0.0
    %517 = vmatprep.subr.mxu0 0.0
    %518 = vmatpush1.msra.mxu0 0.0
    %519 = vmatprep.subr.mxu0 0.0
    %520 = vmatpush1.msra.mxu0 0.0
    %521 = vmatprep.subr.mxu0 0.0
    %522 = vmatpush1.msra.mxu0 0.0
    %523 = vmatprep.subr.mxu0 0.0
    %524 = vmatpush1.msra.mxu0 0.0
    %525 = vmatprep.subr.mxu0 0.0
    %526 = vmatpush1.msra.mxu0 0.0
    %527 = vmatprep.subr.mxu0 0.0
    %528 = vmatpush1.msra.mxu0 0.0
    %529 = vmatprep.subr.mxu0 0.0
    %530 = vmatpush1.msra.mxu0 0.0
    %531 = vmatprep.subr.mxu0 0.0
    %532 = vmatpush1.msra.mxu0 0.0
    %533 = vmatprep.subr.mxu0 0.0
    %534 = vmatpush1.msra.mxu0 0.0
    %535 = vmatprep.mubr.f32.mxu0 0.0
    %536 = vmatmul.mubr.f32.gmra.mrb[0].mxu0 %v460
    %v537 = vpop.f32.mrb[0].mxu0
    %v538 = vadd.f32 %v441, %v537
    %v539 = vpop.f32.mrb[0].mxu0
    %540 = vmatprep.mubr.f32.mxu0 0.0
    %541 = vmatmul.mubr.f32.gmra.mrb[0].mxu0 %v463
    %v542 = vpop.f32.mrb[0].mxu0
    %v543 = vadd.f32 %v446, %v542
    %v544 = vpop.f32.mrb[0].mxu0
    %545 = vmatprep.mubr.f32.mxu0 0.0
    %546 = vmatmul.mubr.f32.gmra.mrb[0].mxu0 %v466
    %v547 = vpop.f32.mrb[0].mxu0
    %v548 = vadd.f32 %v451, %v547
    %v549 = vpop.f32.mrb[0].mxu0
    %550 = vmatprep.mubr.f32.mxu0 0.0
    %551 = vmatmul.mubr.f32.gmra.mrb[0].mxu0 %v469
    %v552 = vpop.f32.mrb[0].mxu0
    %v553 = vadd.f32 %v456, %v552
    %v554 = vpop.f32.mrb[0].mxu0
    %555 = vdwg.mxu0
    %v557 = vlaneseq
    %v558 = vshrl.u32 %v557, 7
    %v559 = vsub.s32 0, %v558
    %v560 = vrot.slane %v262, %v559
    %v562 = vadd.f32 %v538, %v560
    %v563 = vadd.f32 %v543, %v560
    %v564 = vadd.f32 %v548, %v560
    %v565 = vadd.f32 %v553, %v560
    %v566 = vmax.f32 %v562, 0.0
    %v567 = vmax.f32 %v563, 0.0
    %v568 = vmax.f32 %v564, 0.0
    %v569 = vmax.f32 %v565, 0.0
    %v570 = vld [vmem:[#allocation11] sm:$0xff]
    %v571 = vld [vmem:[#allocation11 + $0x8] sm:$0xff]
    %v572 = vld [vmem:[#allocation11 + $0x10] sm:$0xff]
    %v573 = vld [vmem:[#allocation11 + $0x18] sm:$0xff]
    %v574 = vld [vmem:[#allocation11 + $0x20] sm:$0xff]
    %v575 = vld [vmem:[#allocation11 + $0x28] sm:$0xff]
    %v576 = vld [vmem:[#allocation11 + $0x30] sm:$0xff]
    %v577 = vld [vmem:[#allocation11 + $0x38] sm:$0xff]
    %v578 = vld [vmem:[#allocation11 + $0x40] sm:$0xff]
    %v579 = vld [vmem:[#allocation11 + $0x48] sm:$0xff]
    %v580 = vld [vmem:[#allocation11 + $0x50] sm:$0xff]
    %v581 = vld [vmem:[#allocation11 + $0x58] sm:$0xff]
    %v582 = vld [vmem:[#allocation11 + $0x60] sm:$0xff]
    %v583 = vld [vmem:[#allocation11 + $0x68] sm:$0xff]
    %v584 = vld [vmem:[#allocation11 + $0x70] sm:$0xff]
    %v585 = vld [vmem:[#allocation11 + $0x78] sm:$0xff]
    %v586 = vld [vmem:[#allocation11 + $0x80] sm:$0xff]
    %v587 = vld [vmem:[#allocation11 + $0x88] sm:$0xff]
    %v588 = vld [vmem:[#allocation11 + $0x90] sm:$0xff]
    %v589 = vld [vmem:[#allocation11 + $0x98] sm:$0xff]
    %v590 = vld [vmem:[#allocation11 + $0xa0] sm:$0xff]
    %v591 = vld [vmem:[#allocation11 + $0xa8] sm:$0xff]
    %v592 = vld [vmem:[#allocation11 + $0xb0] sm:$0xff]
    %v593 = vld [vmem:[#allocation11 + $0xb8] sm:$0xff]
    %v594 = vld [vmem:[#allocation11 + $0xc0] sm:$0xff]
    %v595 = vld [vmem:[#allocation11 + $0xc8] sm:$0xff]
    %v596 = vld [vmem:[#allocation11 + $0xd0] sm:$0xff]
    %v597 = vld [vmem:[#allocation11 + $0xd8] sm:$0xff]
    %v598 = vld [vmem:[#allocation11 + $0xe0] sm:$0xff]
    %v599 = vld [vmem:[#allocation11 + $0xe8] sm:$0xff]
    %v600 = vld [vmem:[#allocation11 + $0xf0] sm:$0xff]
    %v601 = vld [vmem:[#allocation11 + $0xf8] sm:$0xff]
    %v602 = vld [vmem:[#allocation13] sm:$0xff]
    %v603 = vld [vmem:[#allocation13 + $0x8] sm:$0xff]
    %v604 = vld [vmem:[#allocation13 + $0x10] sm:$0xff]
    %v605 = vld [vmem:[#allocation13 + $0x18] sm:$0xff]
    %v606 = vld [vmem:[#allocation13 + $0x20] sm:$0xff]
    %v607 = vld [vmem:[#allocation13 + $0x28] sm:$0xff]
    %v608 = vld [vmem:[#allocation13 + $0x30] sm:$0xff]
    %v609 = vld [vmem:[#allocation13 + $0x38] sm:$0xff]
    %v610 = vld [vmem:[#allocation13 + $0x40] sm:$0xff]
    %v611 = vld [vmem:[#allocation13 + $0x48] sm:$0xff]
    %v612 = vld [vmem:[#allocation13 + $0x50] sm:$0xff]
    %v613 = vld [vmem:[#allocation13 + $0x58] sm:$0xff]
    %v614 = vld [vmem:[#allocation13 + $0x60] sm:$0xff]
    %v615 = vld [vmem:[#allocation13 + $0x68] sm:$0xff]
    %v616 = vld [vmem:[#allocation13 + $0x70] sm:$0xff]
    %v617 = vld [vmem:[#allocation13 + $0x78] sm:$0xff]
    %v618 = vld [vmem:[#allocation13 + $0x80] sm:$0xff]
    %v619 = vld [vmem:[#allocation13 + $0x88] sm:$0xff]
    %v620 = vld [vmem:[#allocation13 + $0x90] sm:$0xff]
    %v621 = vld [vmem:[#allocation13 + $0x98] sm:$0xff]
    %v622 = vld [vmem:[#allocation13 + $0xa0] sm:$0xff]
    %v623 = vld [vmem:[#allocation13 + $0xa8] sm:$0xff]
    %v624 = vld [vmem:[#allocation13 + $0xb0] sm:$0xff]
    %v625 = vld [vmem:[#allocation13 + $0xb8] sm:$0xff]
    %v626 = vld [vmem:[#allocation13 + $0xc0] sm:$0xff]
    %v627 = vld [vmem:[#allocation13 + $0xc8] sm:$0xff]
    %v628 = vld [vmem:[#allocation13 + $0xd0] sm:$0xff]
    %v629 = vld [vmem:[#allocation13 + $0xd8] sm:$0xff]
    %v630 = vld [vmem:[#allocation13 + $0xe0] sm:$0xff]
    %v631 = vld [vmem:[#allocation13 + $0xe8] sm:$0xff]
    %v632 = vld [vmem:[#allocation13 + $0xf0] sm:$0xff]
    %v633 = vld [vmem:[#allocation13 + $0xf8] sm:$0xff]
    %v634 = vld [vmem:[#allocation14] sm:$0x3]
    %635 = vmatprep.subr.mxu0 0.0
    %636 = vmatpush1.msra.mxu0 %v566
    %637 = vmatprep.subr.mxu0 0.0
    %638 = vmatpush1.msra.mxu0 %v567
    %639 = vmatprep.subr.mxu0 0.0
    %640 = vmatpush1.msra.mxu0 %v568
    %641 = vmatprep.subr.mxu0 0.0
    %642 = vmatpush1.msra.mxu0 %v569
    %643 = vmatprep.subr.mxu0 0.0
    %644 = vmatpush1.msra.mxu0 0.0
    %645 = vmatprep.subr.mxu0 0.0
    %646 = vmatpush1.msra.mxu0 0.0
    %647 = vmatprep.subr.mxu0 0.0
    %648 = vmatpush1.msra.mxu0 0.0
    %649 = vmatprep.subr.mxu0 0.0
    %650 = vmatpush1.msra.mxu0 0.0
    %651 = vmatprep.subr.mxu0 0.0
    %652 = vmatpush1.msra.mxu0 0.0
    %653 = vmatprep.subr.mxu0 0.0
    %654 = vmatpush1.msra.mxu0 0.0
    %655 = vmatprep.subr.mxu0 0.0
    %656 = vmatpush1.msra.mxu0 0.0
    %657 = vmatprep.subr.mxu0 0.0
    %658 = vmatpush1.msra.mxu0 0.0
    %659 = vmatprep.subr.mxu0 0.0
    %660 = vmatpush1.msra.mxu0 0.0
    %661 = vmatprep.subr.mxu0 0.0
    %662 = vmatpush1.msra.mxu0 0.0
    %663 = vmatprep.subr.mxu0 0.0
    %664 = vmatpush1.msra.mxu0 0.0
    %665 = vmatprep.subr.mxu0 0.0
    %666 = vmatpush1.msra.mxu0 0.0
    %667 = vmatprep.subr.mxu0 0.0
    %668 = vmatpush1.msra.mxu0 0.0
    %669 = vmatprep.subr.mxu0 0.0
    %670 = vmatpush1.msra.mxu0 0.0
    %671 = vmatprep.subr.mxu0 0.0
    %672 = vmatpush1.msra.mxu0 0.0
    %673 = vmatprep.subr.mxu0 0.0
    %674 = vmatpush1.msra.mxu0 0.0
    %675 = vmatprep.subr.mxu0 0.0
    %676 = vmatpush1.msra.mxu0 0.0
    %677 = vmatprep.subr.mxu0 0.0
    %678 = vmatpush1.msra.mxu0 0.0
    %679 = vmatprep.subr.mxu0 0.0
    %680 = vmatpush1.msra.mxu0 0.0
    %681 = vmatprep.subr.mxu0 0.0
    %682 = vmatpush1.msra.mxu0 0.0
    %683 = vmatprep.subr.mxu0 0.0
    %684 = vmatpush1.msra.mxu0 0.0
    %685 = vmatprep.subr.mxu0 0.0
    %686 = vmatpush1.msra.mxu0 0.0
    %687 = vmatprep.subr.mxu0 0.0
    %688 = vmatpush1.msra.mxu0 0.0
    %689 = vmatprep.subr.mxu0 0.0
    %690 = vmatpush1.msra.mxu0 0.0
    %691 = vmatprep.subr.mxu0 0.0
    %692 = vmatpush1.msra.mxu0 0.0
    %693 = vmatprep.subr.mxu0 0.0
    %694 = vmatpush1.msra.mxu0 0.0
    %695 = vmatprep.subr.mxu0 0.0
    %696 = vmatpush1.msra.mxu0 0.0
    %697 = vmatprep.subr.mxu0 0.0
    %698 = vmatpush1.msra.mxu0 0.0
    %699 = vmatprep.mubr.f32.mxu0 0.0
    %700 = vmatmul.mubr.f32.gmra.mrb[0].mxu0 %v265
    %v701 = vpop.f32.mrb[0].mxu0
    %v702 = vadd.f32 0.0, %v701
    %v703 = vpop.f32.mrb[0].mxu0
    %704 = vmatprep.mubr.f32.mxu0 0.0
    %705 = vmatmul.mubr.f32.gmra.mrb[0].mxu0 %v268
    %v706 = vpop.f32.mrb[0].mxu0
    %v707 = vadd.f32 0.0, %v706
    %v708 = vpop.f32.mrb[0].mxu0
    %709 = vmatprep.mubr.f32.mxu0 0.0
    %710 = vmatmul.mubr.f32.gmra.mrb[0].mxu0 %v271
    %v711 = vpop.f32.mrb[0].mxu0
    %v712 = vadd.f32 0.0, %v711
    %v713 = vpop.f32.mrb[0].mxu0
    %714 = vmatprep.mubr.f32.mxu0 0.0
    %715 = vmatmul.mubr.f32.gmra.mrb[0].mxu0 %v274
    %v716 = vpop.f32.mrb[0].mxu0
    %v717 = vadd.f32 0.0, %v716
    %v718 = vpop.f32.mrb[0].mxu0
    %719 = vdwg.mxu0
    %720 = vmatprep.subr.mxu0 %v603
    %721 = vmatpush1.msra.mxu0 %v602
    %722 = vmatprep.subr.mxu0 %v605
    %723 = vmatpush1.msra.mxu0 %v604
    %724 = vmatprep.subr.mxu0 %v607
    %725 = vmatpush1.msra.mxu0 %v606
    %726 = vmatprep.subr.mxu0 %v609
    %727 = vmatpush1.msra.mxu0 %v608
    %728 = vmatprep.subr.mxu0 %v611
    %729 = vmatpush1.msra.mxu0 %v610
    %730 = vmatprep.subr.mxu0 %v613
    %731 = vmatpush1.msra.mxu0 %v612
    %732 = vmatprep.subr.mxu0 %v615
    %733 = vmatpush1.msra.mxu0 %v614
    %734 = vmatprep.subr.mxu0 %v617
    %735 = vmatpush1.msra.mxu0 %v616
    %736 = vmatprep.subr.mxu0 %v619
    %737 = vmatpush1.msra.mxu0 %v618
    %738 = vmatprep.subr.mxu0 %v621
    %739 = vmatpush1.msra.mxu0 %v620
    %740 = vmatprep.subr.mxu0 %v623
    %741 = vmatpush1.msra.mxu0 %v622
    %742 = vmatprep.subr.mxu0 %v625
    %743 = vmatpush1.msra.mxu0 %v624
    %744 = vmatprep.subr.mxu0 %v627
    %745 = vmatpush1.msra.mxu0 %v626
    %746 = vmatprep.subr.mxu0 %v629
    %747 = vmatpush1.msra.mxu0 %v628
    %748 = vmatprep.subr.mxu0 %v631
    %749 = vmatpush1.msra.mxu0 %v630
    %750 = vmatprep.subr.mxu0 %v633
    %751 = vmatpush1.msra.mxu0 %v632
    %752 = vmatprep.subr.mxu0 0.0
    %753 = vmatpush1.msra.mxu0 0.0
    %754 = vmatprep.subr.mxu0 0.0
    %755 = vmatpush1.msra.mxu0 0.0
    %756 = vmatprep.subr.mxu0 0.0
    %757 = vmatpush1.msra.mxu0 0.0
    %758 = vmatprep.subr.mxu0 0.0
    %759 = vmatpush1.msra.mxu0 0.0
    %760 = vmatprep.subr.mxu0 0.0
    %761 = vmatpush1.msra.mxu0 0.0
    %762 = vmatprep.subr.mxu0 0.0
    %763 = vmatpush1.msra.mxu0 0.0
    %764 = vmatprep.subr.mxu0 0.0
    %765 = vmatpush1.msra.mxu0 0.0
    %766 = vmatprep.subr.mxu0 0.0
    %767 = vmatpush1.msra.mxu0 0.0
    %768 = vmatprep.subr.mxu0 0.0
    %769 = vmatpush1.msra.mxu0 0.0
    %770 = vmatprep.subr.mxu0 0.0
    %771 = vmatpush1.msra.mxu0 0.0
    %772 = vmatprep.subr.mxu0 0.0
    %773 = vmatpush1.msra.mxu0 0.0
    %774 = vmatprep.subr.mxu0 0.0
    %775 = vmatpush1.msra.mxu0 0.0
    %776 = vmatprep.subr.mxu0 0.0
    %777 = vmatpush1.msra.mxu0 0.0
    %778 = vmatprep.subr.mxu0 0.0
    %779 = vmatpush1.msra.mxu0 0.0
    %780 = vmatprep.subr.mxu0 0.0
    %781 = vmatpush1.msra.mxu0 0.0
    %782 = vmatprep.subr.mxu0 0.0
    %783 = vmatpush1.msra.mxu0 0.0
    %784 = vmatprep.mubr.f32.mxu0 0.0
    %785 = vmatmul.mubr.f32.gmra.mrb[0].mxu0 %v702
    %v786 = vpop.f32.mrb[0].mxu0
    %v787 = vadd.f32 0.0, %v786
    %v788 = vpop.f32.mrb[0].mxu0
    %v789 = vadd.f32 0.0, %v788
    %790 = vmatprep.mubr.f32.mxu0 0.0
    %791 = vmatmul.mubr.f32.gmra.mrb[0].mxu0 %v707
    %v792 = vpop.f32.mrb[0].mxu0
    %v793 = vadd.f32 0.0, %v792
    %v794 = vpop.f32.mrb[0].mxu0
    %v795 = vadd.f32 0.0, %v794
    %796 = vmatprep.mubr.f32.mxu0 0.0
    %797 = vmatmul.mubr.f32.gmra.mrb[0].mxu0 %v712
    %v798 = vpop.f32.mrb[0].mxu0
    %v799 = vadd.f32 0.0, %v798
    %v800 = vpop.f32.mrb[0].mxu0
    %v801 = vadd.f32 0.0, %v800
    %802 = vmatprep.mubr.f32.mxu0 0.0
    %803 = vmatmul.mubr.f32.gmra.mrb[0].mxu0 %v717
    %v804 = vpop.f32.mrb[0].mxu0
    %v805 = vadd.f32 0.0, %v804
    %v806 = vpop.f32.mrb[0].mxu0
    %v807 = vadd.f32 0.0, %v806
    %808 = vdwg.mxu0
    %809 = vmatprep.subr.mxu0 %v571
    %810 = vmatpush1.msra.mxu0 %v570
    %811 = vmatprep.subr.mxu0 %v573
    %812 = vmatpush1.msra.mxu0 %v572
    %813 = vmatprep.subr.mxu0 %v575
    %814 = vmatpush1.msra.mxu0 %v574
    %815 = vmatprep.subr.mxu0 %v577
    %816 = vmatpush1.msra.mxu0 %v576
    %817 = vmatprep.subr.mxu0 %v579
    %818 = vmatpush1.msra.mxu0 %v578
    %819 = vmatprep.subr.mxu0 %v581
    %820 = vmatpush1.msra.mxu0 %v580
    %821 = vmatprep.subr.mxu0 %v583
    %822 = vmatpush1.msra.mxu0 %v582
    %823 = vmatprep.subr.mxu0 %v585
    %824 = vmatpush1.msra.mxu0 %v584
    %825 = vmatprep.subr.mxu0 %v587
    %826 = vmatpush1.msra.mxu0 %v586
    %827 = vmatprep.subr.mxu0 %v589
    %828 = vmatpush1.msra.mxu0 %v588
    %829 = vmatprep.subr.mxu0 %v591
    %830 = vmatpush1.msra.mxu0 %v590
    %831 = vmatprep.subr.mxu0 %v593
    %832 = vmatpush1.msra.mxu0 %v592
    %833 = vmatprep.subr.mxu0 %v595
    %834 = vmatpush1.msra.mxu0 %v594
    %835 = vmatprep.subr.mxu0 %v597
    %836 = vmatpush1.msra.mxu0 %v596
    %837 = vmatprep.subr.mxu0 %v599
    %838 = vmatpush1.msra.mxu0 %v598
    %839 = vmatprep.subr.mxu0 %v601
    %840 = vmatpush1.msra.mxu0 %v600
    %841 = vmatprep.subr.mxu0 0.0
    %842 = vmatpush1.msra.mxu0 0.0
    %843 = vmatprep.subr.mxu0 0.0
    %844 = vmatpush1.msra.mxu0 0.0
    %845 = vmatprep.subr.mxu0 0.0
    %846 = vmatpush1.msra.mxu0 0.0
    %847 = vmatprep.subr.mxu0 0.0
    %848 = vmatpush1.msra.mxu0 0.0
    %849 = vmatprep.subr.mxu0 0.0
    %850 = vmatpush1.msra.mxu0 0.0
    %851 = vmatprep.subr.mxu0 0.0
    %852 = vmatpush1.msra.mxu0 0.0
    %853 = vmatprep.subr.mxu0 0.0
    %854 = vmatpush1.msra.mxu0 0.0
    %855 = vmatprep.subr.mxu0 0.0
    %856 = vmatpush1.msra.mxu0 0.0
    %857 = vmatprep.subr.mxu0 0.0
    %858 = vmatpush1.msra.mxu0 0.0
    %859 = vmatprep.subr.mxu0 0.0
    %860 = vmatpush1.msra.mxu0 0.0
    %861 = vmatprep.subr.mxu0 0.0
    %862 = vmatpush1.msra.mxu0 0.0
    %863 = vmatprep.subr.mxu0 0.0
    %864 = vmatpush1.msra.mxu0 0.0
    %865 = vmatprep.subr.mxu0 0.0
    %866 = vmatpush1.msra.mxu0 0.0
    %867 = vmatprep.subr.mxu0 0.0
    %868 = vmatpush1.msra.mxu0 0.0
    %869 = vmatprep.subr.mxu0 0.0
    %870 = vmatpush1.msra.mxu0 0.0
    %871 = vmatprep.subr.mxu0 0.0
    %872 = vmatpush1.msra.mxu0 0.0
    %873 = vmatprep.mubr.f32.mxu0 0.0
    %874 = vmatmul.mubr.f32.gmra.mrb[0].mxu0 %v566
    %v875 = vpop.f32.mrb[0].mxu0
    %v876 = vadd.f32 %v787, %v875
    %v877 = vpop.f32.mrb[0].mxu0
    %v878 = vadd.f32 %v789, %v877
    %879 = vmatprep.mubr.f32.mxu0 0.0
    %880 = vmatmul.mubr.f32.gmra.mrb[0].mxu0 %v567
    %v881 = vpop.f32.mrb[0].mxu0
    %v882 = vadd.f32 %v793, %v881
    %v883 = vpop.f32.mrb[0].mxu0
    %v884 = vadd.f32 %v795, %v883
    %885 = vmatprep.mubr.f32.mxu0 0.0
    %886 = vmatmul.mubr.f32.gmra.mrb[0].mxu0 %v568
    %v887 = vpop.f32.mrb[0].mxu0
    %v888 = vadd.f32 %v799, %v887
    %v889 = vpop.f32.mrb[0].mxu0
    %v890 = vadd.f32 %v801, %v889
    %891 = vmatprep.mubr.f32.mxu0 0.0
    %892 = vmatmul.mubr.f32.gmra.mrb[0].mxu0 %v569
    %v893 = vpop.f32.mrb[0].mxu0
    %v894 = vadd.f32 %v805, %v893
    %v895 = vpop.f32.mrb[0].mxu0
    %v896 = vadd.f32 %v807, %v895
    %897 = vdwg.mxu0
    %v899 = vlaneseq
    %v900 = vshrl.u32 %v899, 7
    %v901 = vsub.s32 0, %v900
    %v902 = vrot.slane %v634, %v901
    %v903 = vlaneseq
    %v904 = vshrl.u32 %v903, 7
    %v905 = vsub.s32 1, %v904
    %v906 = vrot.slane %v634, %v905
    %v909 = vadd.f32 %v876, %v902
    %v910 = vadd.f32 %v878, %v906
    %v911 = vadd.f32 %v882, %v902
    %v912 = vadd.f32 %v884, %v906
    %v913 = vadd.f32 %v888, %v902
    %v914 = vadd.f32 %v890, %v906
    %v915 = vadd.f32 %v894, %v902
    %v916 = vadd.f32 %v896, %v906
    %v917 = vmax.f32 %v909, 0.0
    %v918 = vmax.f32 %v910, 0.0
    %v919 = vmax.f32 %v911, 0.0
    %v920 = vmax.f32 %v912, 0.0
    %v921 = vmax.f32 %v913, 0.0
    %v922 = vmax.f32 %v914, 0.0
    %v923 = vmax.f32 %v915, 0.0
    %v924 = vmax.f32 %v916, 0.0
    %v925 = vld [vmem:[#allocation16] sm:$0xff]
    %v926 = vld [vmem:[#allocation16 + $0x8] sm:$0xff]
    %v927 = vld [vmem:[#allocation16 + $0x10] sm:$0xff]
    %v928 = vld [vmem:[#allocation16 + $0x18] sm:$0xff]
    %v929 = vld [vmem:[#allocation16 + $0x20] sm:$0xff]
    %v930 = vld [vmem:[#allocation16 + $0x28] sm:$0xff]
    %v931 = vld [vmem:[#allocation16 + $0x30] sm:$0xff]
    %v932 = vld [vmem:[#allocation16 + $0x38] sm:$0xff]
    %v933 = vld [vmem:[#allocation16 + $0x40] sm:$0xff]
    %v934 = vld [vmem:[#allocation16 + $0x48] sm:$0xff]
    %v935 = vld [vmem:[#allocation16 + $0x50] sm:$0xff]
    %v936 = vld [vmem:[#allocation16 + $0x58] sm:$0xff]
    %v937 = vld [vmem:[#allocation16 + $0x60] sm:$0xff]
    %v938 = vld [vmem:[#allocation16 + $0x68] sm:$0xff]
    %v939 = vld [vmem:[#allocation16 + $0x70] sm:$0xff]
    %v940 = vld [vmem:[#allocation16 + $0x78] sm:$0xff]
    %v941 = vld [vmem:[#allocation16 + $0x80] sm:$0xff]
    %v942 = vld [vmem:[#allocation16 + $0x88] sm:$0xff]
    %v943 = vld [vmem:[#allocation16 + $0x90] sm:$0xff]
    %v944 = vld [vmem:[#allocation16 + $0x98] sm:$0xff]
    %v945 = vld [vmem:[#allocation16 + $0xa0] sm:$0xff]
    %v946 = vld [vmem:[#allocation16 + $0xa8] sm:$0xff]
    %v947 = vld [vmem:[#allocation16 + $0xb0] sm:$0xff]
    %v948 = vld [vmem:[#allocation16 + $0xb8] sm:$0xff]
    %v949 = vld [vmem:[#allocation16 + $0xc0] sm:$0xff]
    %v950 = vld [vmem:[#allocation16 + $0xc8] sm:$0xff]
    %v951 = vld [vmem:[#allocation16 + $0xd0] sm:$0xff]
    %v952 = vld [vmem:[#allocation16 + $0xd8] sm:$0xff]
    %v953 = vld [vmem:[#allocation16 + $0xe0] sm:$0xff]
    %v954 = vld [vmem:[#allocation16 + $0xe8] sm:$0xff]
    %v955 = vld [vmem:[#allocation16 + $0xf0] sm:$0xff]
    %v956 = vld [vmem:[#allocation16 + $0xf8] sm:$0xff]
    %v957 = vld [vmem:[#allocation16 + $0x100] sm:$0xff]
    %v958 = vld [vmem:[#allocation16 + $0x108] sm:$0xff]
    %v959 = vld [vmem:[#allocation16 + $0x110] sm:$0xff]
    %v960 = vld [vmem:[#allocation16 + $0x118] sm:$0xff]
    %v961 = vld [vmem:[#allocation16 + $0x120] sm:$0xff]
    %v962 = vld [vmem:[#allocation16 + $0x128] sm:$0xff]
    %v963 = vld [vmem:[#allocation16 + $0x130] sm:$0xff]
    %v964 = vld [vmem:[#allocation16 + $0x138] sm:$0xff]
    %v965 = vld [vmem:[#allocation16 + $0x140] sm:$0xff]
    %v966 = vld [vmem:[#allocation16 + $0x148] sm:$0xff]
    %v967 = vld [vmem:[#allocation16 + $0x150] sm:$0xff]
    %v968 = vld [vmem:[#allocation16 + $0x158] sm:$0xff]
    %v969 = vld [vmem:[#allocation16 + $0x160] sm:$0xff]
    %v970 = vld [vmem:[#allocation16 + $0x168] sm:$0xff]
    %v971 = vld [vmem:[#allocation16 + $0x170] sm:$0xff]
    %v972 = vld [vmem:[#allocation16 + $0x178] sm:$0xff]
    %v973 = vld [vmem:[#allocation16 + $0x180] sm:$0xff]
    %v974 = vld [vmem:[#allocation16 + $0x188] sm:$0xff]
    %v975 = vld [vmem:[#allocation16 + $0x190] sm:$0xff]
    %v976 = vld [vmem:[#allocation16 + $0x198] sm:$0xff]
    %v977 = vld [vmem:[#allocation16 + $0x1a0] sm:$0xff]
    %v978 = vld [vmem:[#allocation16 + $0x1a8] sm:$0xff]
    %v979 = vld [vmem:[#allocation16 + $0x1b0] sm:$0xff]
    %v980 = vld [vmem:[#allocation16 + $0x1b8] sm:$0xff]
    %v981 = vld [vmem:[#allocation16 + $0x1c0] sm:$0xff]
    %v982 = vld [vmem:[#allocation16 + $0x1c8] sm:$0xff]
    %v983 = vld [vmem:[#allocation16 + $0x1d0] sm:$0xff]
    %v984 = vld [vmem:[#allocation16 + $0x1d8] sm:$0xff]
    %v985 = vld [vmem:[#allocation16 + $0x1e0] sm:$0xff]
    %v986 = vld [vmem:[#allocation16 + $0x1e8] sm:$0xff]
    %v987 = vld [vmem:[#allocation16 + $0x1f0] sm:$0xff]
    %v988 = vld [vmem:[#allocation16 + $0x1f8] sm:$0xff]
    %v989 = vld [vmem:[#allocation17] sm:$0xff]
    %v990 = vld [vmem:[#allocation17 + $0x8] sm:$0xff]
    %v991 = vld [vmem:[#allocation17 + $0x10] sm:$0xff]
    %v992 = vld [vmem:[#allocation17 + $0x18] sm:$0xff]
    %v993 = vld [vmem:[#allocation17 + $0x20] sm:$0xff]
    %v994 = vld [vmem:[#allocation17 + $0x28] sm:$0xff]
    %v995 = vld [vmem:[#allocation17 + $0x30] sm:$0xff]
    %v996 = vld [vmem:[#allocation17 + $0x38] sm:$0xff]
    %v997 = vld [vmem:[#allocation17 + $0x40] sm:$0xff]
    %v998 = vld [vmem:[#allocation17 + $0x48] sm:$0xff]
    %v999 = vld [vmem:[#allocation17 + $0x50] sm:$0xff]
    %v1000 = vld [vmem:[#allocation17 + $0x58] sm:$0xff]
    %v1001 = vld [vmem:[#allocation17 + $0x60] sm:$0xff]
    %v1002 = vld [vmem:[#allocation17 + $0x68] sm:$0xff]
    %v1003 = vld [vmem:[#allocation17 + $0x70] sm:$0xff]
    %v1004 = vld [vmem:[#allocation17 + $0x78] sm:$0xff]
    %v1005 = vld [vmem:[#allocation17 + $0x80] sm:$0xff]
    %v1006 = vld [vmem:[#allocation17 + $0x88] sm:$0xff]
    %v1007 = vld [vmem:[#allocation17 + $0x90] sm:$0xff]
    %v1008 = vld [vmem:[#allocation17 + $0x98] sm:$0xff]
    %v1009 = vld [vmem:[#allocation17 + $0xa0] sm:$0xff]
    %v1010 = vld [vmem:[#allocation17 + $0xa8] sm:$0xff]
    %v1011 = vld [vmem:[#allocation17 + $0xb0] sm:$0xff]
    %v1012 = vld [vmem:[#allocation17 + $0xb8] sm:$0xff]
    %v1013 = vld [vmem:[#allocation17 + $0xc0] sm:$0xff]
    %v1014 = vld [vmem:[#allocation17 + $0xc8] sm:$0xff]
    %v1015 = vld [vmem:[#allocation17 + $0xd0] sm:$0xff]
    %v1016 = vld [vmem:[#allocation17 + $0xd8] sm:$0xff]
    %v1017 = vld [vmem:[#allocation17 + $0xe0] sm:$0xff]
    %v1018 = vld [vmem:[#allocation17 + $0xe8] sm:$0xff]
    %v1019 = vld [vmem:[#allocation17 + $0xf0] sm:$0xff]
    %v1020 = vld [vmem:[#allocation17 + $0xf8] sm:$0xff]
    %v1021 = vld [vmem:[#allocation17 + $0x100] sm:$0xff]
    %v1022 = vld [vmem:[#allocation17 + $0x108] sm:$0xff]
    %v1023 = vld [vmem:[#allocation17 + $0x110] sm:$0xff]
    %v1024 = vld [vmem:[#allocation17 + $0x118] sm:$0xff]
    %v1025 = vld [vmem:[#allocation17 + $0x120] sm:$0xff]
    %v1026 = vld [vmem:[#allocation17 + $0x128] sm:$0xff]
    %v1027 = vld [vmem:[#allocation17 + $0x130] sm:$0xff]
    %v1028 = vld [vmem:[#allocation17 + $0x138] sm:$0xff]
    %v1029 = vld [vmem:[#allocation17 + $0x140] sm:$0xff]
    %v1030 = vld [vmem:[#allocation17 + $0x148] sm:$0xff]
    %v1031 = vld [vmem:[#allocation17 + $0x150] sm:$0xff]
    %v1032 = vld [vmem:[#allocation17 + $0x158] sm:$0xff]
    %v1033 = vld [vmem:[#allocation17 + $0x160] sm:$0xff]
    %v1034 = vld [vmem:[#allocation17 + $0x168] sm:$0xff]
    %v1035 = vld [vmem:[#allocation17 + $0x170] sm:$0xff]
    %v1036 = vld [vmem:[#allocation17 + $0x178] sm:$0xff]
    %v1037 = vld [vmem:[#allocation17 + $0x180] sm:$0xff]
    %v1038 = vld [vmem:[#allocation17 + $0x188] sm:$0xff]
    %v1039 = vld [vmem:[#allocation17 + $0x190] sm:$0xff]
    %v1040 = vld [vmem:[#allocation17 + $0x198] sm:$0xff]
    %v1041 = vld [vmem:[#allocation17 + $0x1a0] sm:$0xff]
    %v1042 = vld [vmem:[#allocation17 + $0x1a8] sm:$0xff]
    %v1043 = vld [vmem:[#allocation17 + $0x1b0] sm:$0xff]
    %v1044 = vld [vmem:[#allocation17 + $0x1b8] sm:$0xff]
    %v1045 = vld [vmem:[#allocation17 + $0x1c0] sm:$0xff]
    %v1046 = vld [vmem:[#allocation17 + $0x1c8] sm:$0xff]
    %v1047 = vld [vmem:[#allocation17 + $0x1d0] sm:$0xff]
    %v1048 = vld [vmem:[#allocation17 + $0x1d8] sm:$0xff]
    %v1049 = vld [vmem:[#allocation17 + $0x1e0] sm:$0xff]
    %v1050 = vld [vmem:[#allocation17 + $0x1e8] sm:$0xff]
    %v1051 = vld [vmem:[#allocation17 + $0x1f0] sm:$0xff]
    %v1052 = vld [vmem:[#allocation17 + $0x1f8] sm:$0xff]
    %v1053 = vld [vmem:[#allocation19] sm:$0x3]
    %1054 = vmatprep.subr.mxu0 %v918
    %1055 = vmatpush1.msra.mxu0 %v917
    %1056 = vmatprep.subr.mxu0 %v920
    %1057 = vmatpush1.msra.mxu0 %v919
    %1058 = vmatprep.subr.mxu0 %v922
    %1059 = vmatpush1.msra.mxu0 %v921
    %1060 = vmatprep.subr.mxu0 %v924
    %1061 = vmatpush1.msra.mxu0 %v923
    %1062 = vmatprep.subr.mxu0 0.0
    %1063 = vmatpush1.msra.mxu0 0.0
    %1064 = vmatprep.subr.mxu0 0.0
    %1065 = vmatpush1.msra.mxu0 0.0
    %1066 = vmatprep.subr.mxu0 0.0
    %1067 = vmatpush1.msra.mxu0 0.0
    %1068 = vmatprep.subr.mxu0 0.0
    %1069 = vmatpush1.msra.mxu0 0.0
    %1070 = vmatprep.subr.mxu0 0.0
    %1071 = vmatpush1.msra.mxu0 0.0
    %1072 = vmatprep.subr.mxu0 0.0
    %1073 = vmatpush1.msra.mxu0 0.0
    %1074 = vmatprep.subr.mxu0 0.0
    %1075 = vmatpush1.msra.mxu0 0.0
    %1076 = vmatprep.subr.mxu0 0.0
    %1077 = vmatpush1.msra.mxu0 0.0
    %1078 = vmatprep.subr.mxu0 0.0
    %1079 = vmatpush1.msra.mxu0 0.0
    %1080 = vmatprep.subr.mxu0 0.0
    %1081 = vmatpush1.msra.mxu0 0.0
    %1082 = vmatprep.subr.mxu0 0.0
    %1083 = vmatpush1.msra.mxu0 0.0
    %1084 = vmatprep.subr.mxu0 0.0
    %1085 = vmatpush1.msra.mxu0 0.0
    %1086 = vmatprep.subr.mxu0 0.0
    %1087 = vmatpush1.msra.mxu0 0.0
    %1088 = vmatprep.subr.mxu0 0.0
    %1089 = vmatpush1.msra.mxu0 0.0
    %1090 = vmatprep.subr.mxu0 0.0
    %1091 = vmatpush1.msra.mxu0 0.0
    %1092 = vmatprep.subr.mxu0 0.0
    %1093 = vmatpush1.msra.mxu0 0.0
    %1094 = vmatprep.subr.mxu0 0.0
    %1095 = vmatpush1.msra.mxu0 0.0
    %1096 = vmatprep.subr.mxu0 0.0
    %1097 = vmatpush1.msra.mxu0 0.0
    %1098 = vmatprep.subr.mxu0 0.0
    %1099 = vmatpush1.msra.mxu0 0.0
    %1100 = vmatprep.subr.mxu0 0.0
    %1101 = vmatpush1.msra.mxu0 0.0
    %1102 = vmatprep.subr.mxu0 0.0
    %1103 = vmatpush1.msra.mxu0 0.0
    %1104 = vmatprep.subr.mxu0 0.0
    %1105 = vmatpush1.msra.mxu0 0.0
    %1106 = vmatprep.subr.mxu0 0.0
    %1107 = vmatpush1.msra.mxu0 0.0
    %1108 = vmatprep.subr.mxu0 0.0
    %1109 = vmatpush1.msra.mxu0 0.0
    %1110 = vmatprep.subr.mxu0 0.0
    %1111 = vmatpush1.msra.mxu0 0.0
    %1112 = vmatprep.subr.mxu0 0.0
    %1113 = vmatpush1.msra.mxu0 0.0
    %1114 = vmatprep.subr.mxu0 0.0
    %1115 = vmatpush1.msra.mxu0 0.0
    %1116 = vmatprep.subr.mxu0 0.0
    %1117 = vmatpush1.msra.mxu0 0.0
    %1118 = vmatprep.mubr.f32.mxu0 0.0
    %1119 = vmatmul.mubr.f32.gmra.mrb[0].mxu0 %v265
    %v1120 = vpop.f32.mrb[0].mxu0
    %v1121 = vadd.f32 0.0, %v1120
    %v1122 = vpop.f32.mrb[0].mxu0
    %v1123 = vadd.f32 0.0, %v1122
    %1124 = vmatprep.mubr.f32.mxu0 0.0
    %1125 = vmatmul.mubr.f32.gmra.mrb[0].mxu0 %v268
    %v1126 = vpop.f32.mrb[0].mxu0
    %v1127 = vadd.f32 0.0, %v1126
    %v1128 = vpop.f32.mrb[0].mxu0
    %v1129 = vadd.f32 0.0, %v1128
    %1130 = vmatprep.mubr.f32.mxu0 0.0
    %1131 = vmatmul.mubr.f32.gmra.mrb[0].mxu0 %v271
    %v1132 = vpop.f32.mrb[0].mxu0
    %v1133 = vadd.f32 0.0, %v1132
    %v1134 = vpop.f32.mrb[0].mxu0
    %v1135 = vadd.f32 0.0, %v1134
    %1136 = vmatprep.mubr.f32.mxu0 0.0
    %1137 = vmatmul.mubr.f32.gmra.mrb[0].mxu0 %v274
    %v1138 = vpop.f32.mrb[0].mxu0
    %v1139 = vadd.f32 0.0, %v1138
    %v1140 = vpop.f32.mrb[0].mxu0
    %v1141 = vadd.f32 0.0, %v1140
    %1142 = vdwg.mxu0
    %1143 = vmatprep.subr.mxu0 %v990
    %1144 = vmatpush1.msra.mxu0 %v989
    %1145 = vmatprep.subr.mxu0 %v992
    %1146 = vmatpush1.msra.mxu0 %v991
    %1147 = vmatprep.subr.mxu0 %v994
    %1148 = vmatpush1.msra.mxu0 %v993
    %1149 = vmatprep.subr.mxu0 %v996
    %1150 = vmatpush1.msra.mxu0 %v995
    %1151 = vmatprep.subr.mxu0 %v998
    %1152 = vmatpush1.msra.mxu0 %v997
    %1153 = vmatprep.subr.mxu0 %v1000
    %1154 = vmatpush1.msra.mxu0 %v999
    %1155 = vmatprep.subr.mxu0 %v1002
    %1156 = vmatpush1.msra.mxu0 %v1001
    %1157 = vmatprep.subr.mxu0 %v1004
    %1158 = vmatpush1.msra.mxu0 %v1003
    %1159 = vmatprep.subr.mxu0 %v1006
    %1160 = vmatpush1.msra.mxu0 %v1005
    %1161 = vmatprep.subr.mxu0 %v1008
    %1162 = vmatpush1.msra.mxu0 %v1007
    %1163 = vmatprep.subr.mxu0 %v1010
    %1164 = vmatpush1.msra.mxu0 %v1009
    %1165 = vmatprep.subr.mxu0 %v1012
    %1166 = vmatpush1.msra.mxu0 %v1011
    %1167 = vmatprep.subr.mxu0 %v1014
    %1168 = vmatpush1.msra.mxu0 %v1013
    %1169 = vmatprep.subr.mxu0 %v1016
    %1170 = vmatpush1.msra.mxu0 %v1015
    %1171 = vmatprep.subr.mxu0 %v1018
    %1172 = vmatpush1.msra.mxu0 %v1017
    %1173 = vmatprep.subr.mxu0 %v1020
    %1174 = vmatpush1.msra.mxu0 %v1019
    %1175 = vmatprep.subr.mxu0 %v1022
    %1176 = vmatpush1.msra.mxu0 %v1021
    %1177 = vmatprep.subr.mxu0 %v1024
    %1178 = vmatpush1.msra.mxu0 %v1023
    %1179 = vmatprep.subr.mxu0 %v1026
    %1180 = vmatpush1.msra.mxu0 %v1025
    %1181 = vmatprep.subr.mxu0 %v1028
    %1182 = vmatpush1.msra.mxu0 %v1027
    %1183 = vmatprep.subr.mxu0 %v1030
    %1184 = vmatpush1.msra.mxu0 %v1029
    %1185 = vmatprep.subr.mxu0 %v1032
    %1186 = vmatpush1.msra.mxu0 %v1031
    %1187 = vmatprep.subr.mxu0 %v1034
    %1188 = vmatpush1.msra.mxu0 %v1033
    %1189 = vmatprep.subr.mxu0 %v1036
    %1190 = vmatpush1.msra.mxu0 %v1035
    %1191 = vmatprep.subr.mxu0 %v1038
    %1192 = vmatpush1.msra.mxu0 %v1037
    %1193 = vmatprep.subr.mxu0 %v1040
    %1194 = vmatpush1.msra.mxu0 %v1039
    %1195 = vmatprep.subr.mxu0 %v1042
    %1196 = vmatpush1.msra.mxu0 %v1041
    %1197 = vmatprep.subr.mxu0 %v1044
    %1198 = vmatpush1.msra.mxu0 %v1043
    %1199 = vmatprep.subr.mxu0 %v1046
    %1200 = vmatpush1.msra.mxu0 %v1045
    %1201 = vmatprep.subr.mxu0 %v1048
    %1202 = vmatpush1.msra.mxu0 %v1047
    %1203 = vmatprep.subr.mxu0 %v1050
    %1204 = vmatpush1.msra.mxu0 %v1049
    %1205 = vmatprep.subr.mxu0 %v1052
    %1206 = vmatpush1.msra.mxu0 %v1051
    %1207 = vmatprep.mubr.f32.mxu0 %v1123
    %1208 = vmatmul.mubr.f32.gmra.mrb[0].mxu0 %v1121
    %v1209 = vpop.f32.mrb[0].mxu0
    %v1210 = vadd.f32 0.0, %v1209
    %v1211 = vpop.f32.mrb[0].mxu0
    %v1212 = vadd.f32 0.0, %v1211
    %1213 = vmatprep.mubr.f32.mxu0 %v1129
    %1214 = vmatmul.mubr.f32.gmra.mrb[0].mxu0 %v1127
    %v1215 = vpop.f32.mrb[0].mxu0
    %v1216 = vadd.f32 0.0, %v1215
    %v1217 = vpop.f32.mrb[0].mxu0
    %v1218 = vadd.f32 0.0, %v1217
    %1219 = vmatprep.mubr.f32.mxu0 %v1135
    %1220 = vmatmul.mubr.f32.gmra.mrb[0].mxu0 %v1133
    %v1221 = vpop.f32.mrb[0].mxu0
    %v1222 = vadd.f32 0.0, %v1221
    %v1223 = vpop.f32.mrb[0].mxu0
    %v1224 = vadd.f32 0.0, %v1223
    %1225 = vmatprep.mubr.f32.mxu0 %v1141
    %1226 = vmatmul.mubr.f32.gmra.mrb[0].mxu0 %v1139
    %v1227 = vpop.f32.mrb[0].mxu0
    %v1228 = vpop.f32.mrb[0].mxu0
    %1229 = vdwg.mxu0
    %1230 = vmatprep.subr.mxu0 %v926
    %1231 = vmatpush1.msra.mxu0 %v925
    %1232 = vmatprep.subr.mxu0 %v928
    %1233 = vmatpush1.msra.mxu0 %v927
    %1234 = vmatprep.subr.mxu0 %v930
    %1235 = vmatpush1.msra.mxu0 %v929
    %1236 = vmatprep.subr.mxu0 %v932
    %1237 = vmatpush1.msra.mxu0 %v931
    %1238 = vmatprep.subr.mxu0 %v934
    %1239 = vmatpush1.msra.mxu0 %v933
    %1240 = vmatprep.subr.mxu0 %v936
    %1241 = vmatpush1.msra.mxu0 %v935
    %1242 = vmatprep.subr.mxu0 %v938
    %1243 = vmatpush1.msra.mxu0 %v937
    %1244 = vmatprep.subr.mxu0 %v940
    %1245 = vmatpush1.msra.mxu0 %v939
    %1246 = vmatprep.subr.mxu0 %v942
    %1247 = vmatpush1.msra.mxu0 %v941
    %1248 = vmatprep.subr.mxu0 %v944
    %1249 = vmatpush1.msra.mxu0 %v943
    %1250 = vmatprep.subr.mxu0 %v946
    %1251 = vmatpush1.msra.mxu0 %v945
    %1252 = vmatprep.subr.mxu0 %v948
    %1253 = vmatpush1.msra.mxu0 %v947
    %1254 = vmatprep.subr.mxu0 %v950
    %1255 = vmatpush1.msra.mxu0 %v949
    %1256 = vmatprep.subr.mxu0 %v952
    %1257 = vmatpush1.msra.mxu0 %v951
    %1258 = vmatprep.subr.mxu0 %v954
    %1259 = vmatpush1.msra.mxu0 %v953
    %1260 = vmatprep.subr.mxu0 %v956
    %1261 = vmatpush1.msra.mxu0 %v955
    %1262 = vmatprep.subr.mxu0 %v958
    %1263 = vmatpush1.msra.mxu0 %v957
    %1264 = vmatprep.subr.mxu0 %v960
    %1265 = vmatpush1.msra.mxu0 %v959
    %1266 = vmatprep.subr.mxu0 %v962
    %1267 = vmatpush1.msra.mxu0 %v961
    %1268 = vmatprep.subr.mxu0 %v964
    %1269 = vmatpush1.msra.mxu0 %v963
    %1270 = vmatprep.subr.mxu0 %v966
    %1271 = vmatpush1.msra.mxu0 %v965
    %1272 = vmatprep.subr.mxu0 %v968
    %1273 = vmatpush1.msra.mxu0 %v967
    %1274 = vmatprep.subr.mxu0 %v970
    %1275 = vmatpush1.msra.mxu0 %v969
    %1276 = vmatprep.subr.mxu0 %v972
    %1277 = vmatpush1.msra.mxu0 %v971
    %1278 = vmatprep.subr.mxu0 %v974
    %1279 = vmatpush1.msra.mxu0 %v973
    %1280 = vmatprep.subr.mxu0 %v976
    %1281 = vmatpush1.msra.mxu0 %v975
    %1282 = vmatprep.subr.mxu0 %v978
    %1283 = vmatpush1.msra.mxu0 %v977
    %1284 = vmatprep.subr.mxu0 %v980
    %1285 = vmatpush1.msra.mxu0 %v979
    %1286 = vmatprep.subr.mxu0 %v982
    %1287 = vmatpush1.msra.mxu0 %v981
    %1288 = vmatprep.subr.mxu0 %v984
    %1289 = vmatpush1.msra.mxu0 %v983
    %1290 = vmatprep.subr.mxu0 %v986
    %1291 = vmatpush1.msra.mxu0 %v985
    %1292 = vmatprep.subr.mxu0 %v988
    %1293 = vmatpush1.msra.mxu0 %v987
    %1294 = vmatprep.mubr.f32.mxu0 %v918
    %1295 = vmatmul.mubr.f32.gmra.mrb[0].mxu0 %v917
    %v1296 = vpop.f32.mrb[0].mxu0
    %v1297 = vadd.f32 %v1210, %v1296
    %v1298 = vpop.f32.mrb[0].mxu0
    %v1299 = vadd.f32 %v1212, %v1298
    %1300 = vmatprep.mubr.f32.mxu0 %v920
    %1301 = vmatmul.mubr.f32.gmra.mrb[0].mxu0 %v919
    %v1302 = vpop.f32.mrb[0].mxu0
    %v1303 = vadd.f32 %v1216, %v1302
    %v1304 = vpop.f32.mrb[0].mxu0
    %v1305 = vadd.f32 %v1218, %v1304
    %1306 = vmatprep.mubr.f32.mxu0 %v922
    %1307 = vmatmul.mubr.f32.gmra.mrb[0].mxu0 %v921
    %v1308 = vpop.f32.mrb[0].mxu0
    %v1309 = vadd.f32 %v1222, %v1308
    %v1310 = vpop.f32.mrb[0].mxu0
    %v1311 = vadd.f32 %v1224, %v1310
    %1312 = vmatprep.mubr.f32.mxu0 %v924
    %1313 = vmatmul.mubr.f32.gmra.mrb[0].mxu0 %v923
    %v1314 = vpop.f32.mrb[0].mxu0
    %v1315 = vpop.f32.mrb[0].mxu0
    %1316 = vdwg.mxu0
    %v1318 = vlaneseq
    %v1319 = vshrl.u32 %v1318, 7
    %v1320 = vsub.s32 0, %v1319
    %v1321 = vrot.slane %v1053, %v1320
    %v1322 = vlaneseq
    %v1323 = vshrl.u32 %v1322, 7
    %v1324 = vsub.s32 1, %v1323
    %v1325 = vrot.slane %v1053, %v1324
    %v1328 = vadd.f32 %v1297, %v1321
    %v1329 = vadd.f32 %v1299, %v1325
    %v1330 = vadd.f32 %v1303, %v1321
    %v1331 = vadd.f32 %v1305, %v1325
    %v1332 = vadd.f32 %v1309, %v1321
    %v1333 = vadd.f32 %v1311, %v1325
    %v1334 = vmax.f32 %v1328, 0.0
    %v1335 = vmax.f32 %v1329, 0.0
    %v1336 = vmax.f32 %v1330, 0.0
    %v1337 = vmax.f32 %v1331, 0.0
    %v1338 = vmax.f32 %v1332, 0.0
    %v1339 = vmax.f32 %v1333, 0.0
    %v1342 = vrot.slane %v1334, 4
    %v1343 = vrot.slane %v1335, 4
    %v1348 = vrot.slane %v1336, 4
    %v1349 = vrot.slane %v1337, 4
    %v1352 = vld [vmem:[#allocation20] sm:$0xff]
    %v1353 = vld [vmem:[#allocation20 + $0x8] sm:$0xff]
    %v1354 = vld [vmem:[#allocation20 + $0x10] sm:$0xff]
    %v1355 = vld [vmem:[#allocation20 + $0x18] sm:$0xff]
    %v1356 = vld [vmem:[#allocation20 + $0x20] sm:$0xff]
    %v1357 = vld [vmem:[#allocation20 + $0x28] sm:$0xff]
    %v1358 = vld [vmem:[#allocation20 + $0x30] sm:$0xff]
    %v1359 = vld [vmem:[#allocation20 + $0x38] sm:$0xff]
    %v1360 = vld [vmem:[#allocation20 + $0x40] sm:$0xff]
    %v1361 = vld [vmem:[#allocation20 + $0x48] sm:$0xff]
    %v1362 = vld [vmem:[#allocation20 + $0x50] sm:$0xff]
    %v1363 = vld [vmem:[#allocation20 + $0x58] sm:$0xff]
    %v1364 = vld [vmem:[#allocation20 + $0x60] sm:$0xff]
    %v1365 = vld [vmem:[#allocation20 + $0x68] sm:$0xff]
    %v1366 = vld [vmem:[#allocation20 + $0x70] sm:$0xff]
    %v1367 = vld [vmem:[#allocation20 + $0x78] sm:$0xff]
    %v1368 = vld [vmem:[#allocation20 + $0x80] sm:$0xff]
    %v1369 = vld [vmem:[#allocation20 + $0x88] sm:$0xff]
    %v1370 = vld [vmem:[#allocation20 + $0x90] sm:$0xff]
    %v1371 = vld [vmem:[#allocation20 + $0x98] sm:$0xff]
    %v1372 = vld [vmem:[#allocation20 + $0xa0] sm:$0xff]
    %v1373 = vld [vmem:[#allocation20 + $0xa8] sm:$0xff]
    %v1374 = vld [vmem:[#allocation20 + $0xb0] sm:$0xff]
    %v1375 = vld [vmem:[#allocation20 + $0xb8] sm:$0xff]
    %v1376 = vld [vmem:[#allocation20 + $0xc0] sm:$0xff]
    %v1377 = vld [vmem:[#allocation20 + $0xc8] sm:$0xff]
    %v1378 = vld [vmem:[#allocation20 + $0xd0] sm:$0xff]
    %v1379 = vld [vmem:[#allocation20 + $0xd8] sm:$0xff]
    %v1380 = vld [vmem:[#allocation20 + $0xe0] sm:$0xff]
    %v1381 = vld [vmem:[#allocation20 + $0xe8] sm:$0xff]
    %v1382 = vld [vmem:[#allocation20 + $0xf0] sm:$0xff]
    %v1383 = vld [vmem:[#allocation20 + $0xf8] sm:$0xff]
    %v1384 = vld [vmem:[#allocation20 + $0x100] sm:$0xff]
    %v1385 = vld [vmem:[#allocation20 + $0x108] sm:$0xff]
    %v1386 = vld [vmem:[#allocation20 + $0x110] sm:$0xff]
    %v1387 = vld [vmem:[#allocation20 + $0x118] sm:$0xff]
    %v1388 = vld [vmem:[#allocation20 + $0x120] sm:$0xff]
    %v1389 = vld [vmem:[#allocation20 + $0x128] sm:$0xff]
    %v1390 = vld [vmem:[#allocation20 + $0x130] sm:$0xff]
    %v1391 = vld [vmem:[#allocation20 + $0x138] sm:$0xff]
    %v1392 = vld [vmem:[#allocation20 + $0x140] sm:$0xff]
    %v1393 = vld [vmem:[#allocation20 + $0x148] sm:$0xff]
    %v1394 = vld [vmem:[#allocation20 + $0x150] sm:$0xff]
    %v1395 = vld [vmem:[#allocation20 + $0x158] sm:$0xff]
    %v1396 = vld [vmem:[#allocation20 + $0x160] sm:$0xff]
    %v1397 = vld [vmem:[#allocation20 + $0x168] sm:$0xff]
    %v1398 = vld [vmem:[#allocation20 + $0x170] sm:$0xff]
    %v1399 = vld [vmem:[#allocation20 + $0x178] sm:$0xff]
    %v1400 = vld [vmem:[#allocation20 + $0x180] sm:$0xff]
    %v1401 = vld [vmem:[#allocation20 + $0x188] sm:$0xff]
    %v1402 = vld [vmem:[#allocation20 + $0x190] sm:$0xff]
    %v1403 = vld [vmem:[#allocation20 + $0x198] sm:$0xff]
    %v1404 = vld [vmem:[#allocation20 + $0x1a0] sm:$0xff]
    %v1405 = vld [vmem:[#allocation20 + $0x1a8] sm:$0xff]
    %v1406 = vld [vmem:[#allocation20 + $0x1b0] sm:$0xff]
    %v1407 = vld [vmem:[#allocation20 + $0x1b8] sm:$0xff]
    %v1408 = vld [vmem:[#allocation20 + $0x1c0] sm:$0xff]
    %v1409 = vld [vmem:[#allocation20 + $0x1c8] sm:$0xff]
    %v1410 = vld [vmem:[#allocation20 + $0x1d0] sm:$0xff]
    %v1411 = vld [vmem:[#allocation20 + $0x1d8] sm:$0xff]
    %v1412 = vld [vmem:[#allocation20 + $0x1e0] sm:$0xff]
    %v1413 = vld [vmem:[#allocation20 + $0x1e8] sm:$0xff]
    %v1414 = vld [vmem:[#allocation20 + $0x1f0] sm:$0xff]
    %v1415 = vld [vmem:[#allocation20 + $0x1f8] sm:$0xff]
    %v1416 = vld [vmem:[#allocation20 + $0x200] sm:$0xff]
    %v1417 = vld [vmem:[#allocation20 + $0x208] sm:$0xff]
    %v1418 = vld [vmem:[#allocation20 + $0x210] sm:$0xff]
    %v1419 = vld [vmem:[#allocation20 + $0x218] sm:$0xff]
    %v1420 = vld [vmem:[#allocation20 + $0x220] sm:$0xff]
    %v1421 = vld [vmem:[#allocation20 + $0x228] sm:$0xff]
    %v1422 = vld [vmem:[#allocation20 + $0x230] sm:$0xff]
    %v1423 = vld [vmem:[#allocation20 + $0x238] sm:$0xff]
    %v1424 = vld [vmem:[#allocation20 + $0x240] sm:$0xff]
    %v1425 = vld [vmem:[#allocation20 + $0x248] sm:$0xff]
    %v1426 = vld [vmem:[#allocation20 + $0x250] sm:$0xff]
    %v1427 = vld [vmem:[#allocation20 + $0x258] sm:$0xff]
    %v1428 = vld [vmem:[#allocation20 + $0x260] sm:$0xff]
    %v1429 = vld [vmem:[#allocation20 + $0x268] sm:$0xff]
    %v1430 = vld [vmem:[#allocation20 + $0x270] sm:$0xff]
    %v1431 = vld [vmem:[#allocation20 + $0x278] sm:$0xff]
    %v1432 = vld [vmem:[#allocation20 + $0x280] sm:$0xff]
    %v1433 = vld [vmem:[#allocation20 + $0x288] sm:$0xff]
    %v1434 = vld [vmem:[#allocation20 + $0x290] sm:$0xff]
    %v1435 = vld [vmem:[#allocation20 + $0x298] sm:$0xff]
    %v1436 = vld [vmem:[#allocation20 + $0x2a0] sm:$0xff]
    %v1437 = vld [vmem:[#allocation20 + $0x2a8] sm:$0xff]
    %v1438 = vld [vmem:[#allocation20 + $0x2b0] sm:$0xff]
    %v1439 = vld [vmem:[#allocation20 + $0x2b8] sm:$0xff]
    %v1440 = vld [vmem:[#allocation20 + $0x2c0] sm:$0xff]
    %v1441 = vld [vmem:[#allocation20 + $0x2c8] sm:$0xff]
    %v1442 = vld [vmem:[#allocation20 + $0x2d0] sm:$0xff]
    %v1443 = vld [vmem:[#allocation20 + $0x2d8] sm:$0xff]
    %v1444 = vld [vmem:[#allocation20 + $0x2e0] sm:$0xff]
    %v1445 = vld [vmem:[#allocation20 + $0x2e8] sm:$0xff]
    %v1446 = vld [vmem:[#allocation20 + $0x2f0] sm:$0xff]
    %v1447 = vld [vmem:[#allocation20 + $0x2f8] sm:$0xff]
    %v1448 = vld [vmem:[#allocation20 + $0x300] sm:$0xff]
    %v1449 = vld [vmem:[#allocation20 + $0x308] sm:$0xff]
    %v1450 = vld [vmem:[#allocation20 + $0x310] sm:$0xff]
    %v1451 = vld [vmem:[#allocation20 + $0x318] sm:$0xff]
    %v1452 = vld [vmem:[#allocation20 + $0x320] sm:$0xff]
    %v1453 = vld [vmem:[#allocation20 + $0x328] sm:$0xff]
    %v1454 = vld [vmem:[#allocation20 + $0x330] sm:$0xff]
    %v1455 = vld [vmem:[#allocation20 + $0x338] sm:$0xff]
    %v1456 = vld [vmem:[#allocation20 + $0x340] sm:$0xff]
    %v1457 = vld [vmem:[#allocation20 + $0x348] sm:$0xff]
    %v1458 = vld [vmem:[#allocation20 + $0x350] sm:$0xff]
    %v1459 = vld [vmem:[#allocation20 + $0x358] sm:$0xff]
    %v1460 = vld [vmem:[#allocation20 + $0x360] sm:$0xff]
    %v1461 = vld [vmem:[#allocation20 + $0x368] sm:$0xff]
    %v1462 = vld [vmem:[#allocation20 + $0x370] sm:$0xff]
    %v1463 = vld [vmem:[#allocation20 + $0x378] sm:$0xff]
    %v1464 = vld [vmem:[#allocation20 + $0x380] sm:$0xff]
    %v1465 = vld [vmem:[#allocation20 + $0x388] sm:$0xff]
    %v1466 = vld [vmem:[#allocation20 + $0x390] sm:$0xff]
    %v1467 = vld [vmem:[#allocation20 + $0x398] sm:$0xff]
    %v1468 = vld [vmem:[#allocation20 + $0x3a0] sm:$0xff]
    %v1469 = vld [vmem:[#allocation20 + $0x3a8] sm:$0xff]
    %v1470 = vld [vmem:[#allocation20 + $0x3b0] sm:$0xff]
    %v1471 = vld [vmem:[#allocation20 + $0x3b8] sm:$0xff]
    %v1472 = vld [vmem:[#allocation20 + $0x3c0] sm:$0xff]
    %v1473 = vld [vmem:[#allocation20 + $0x3c8] sm:$0xff]
    %v1474 = vld [vmem:[#allocation20 + $0x3d0] sm:$0xff]
    %v1475 = vld [vmem:[#allocation20 + $0x3d8] sm:$0xff]
    %v1476 = vld [vmem:[#allocation20 + $0x3e0] sm:$0xff]
    %v1477 = vld [vmem:[#allocation20 + $0x3e8] sm:$0xff]
    %v1478 = vld [vmem:[#allocation20 + $0x3f0] sm:$0xff]
    %v1479 = vld [vmem:[#allocation20 + $0x3f8] sm:$0xff]
    %v1480 = vld [vmem:[#allocation20 + $0x400] sm:$0xff]
    %v1481 = vld [vmem:[#allocation20 + $0x408] sm:$0xff]
    %v1482 = vld [vmem:[#allocation20 + $0x410] sm:$0xff]
    %v1483 = vld [vmem:[#allocation20 + $0x418] sm:$0xff]
    %v1484 = vld [vmem:[#allocation20 + $0x420] sm:$0xff]
    %v1485 = vld [vmem:[#allocation20 + $0x428] sm:$0xff]
    %v1486 = vld [vmem:[#allocation20 + $0x430] sm:$0xff]
    %v1487 = vld [vmem:[#allocation20 + $0x438] sm:$0xff]
    %v1488 = vld [vmem:[#allocation20 + $0x440] sm:$0xff]
    %v1489 = vld [vmem:[#allocation20 + $0x448] sm:$0xff]
    %v1490 = vld [vmem:[#allocation20 + $0x450] sm:$0xff]
    %v1491 = vld [vmem:[#allocation20 + $0x458] sm:$0xff]
    %v1492 = vld [vmem:[#allocation20 + $0x460] sm:$0xff]
    %v1493 = vld [vmem:[#allocation20 + $0x468] sm:$0xff]
    %v1494 = vld [vmem:[#allocation20 + $0x470] sm:$0xff]
    %v1495 = vld [vmem:[#allocation20 + $0x478] sm:$0xff]
    %v1496 = vld [vmem:[#allocation20 + $0x480] sm:$0xff]
    %v1497 = vld [vmem:[#allocation20 + $0x488] sm:$0xff]
    %v1498 = vld [vmem:[#allocation20 + $0x490] sm:$0xff]
    %v1499 = vld [vmem:[#allocation20 + $0x498] sm:$0xff]
    %v1500 = vld [vmem:[#allocation20 + $0x4a0] sm:$0xff]
    %v1501 = vld [vmem:[#allocation20 + $0x4a8] sm:$0xff]
    %v1502 = vld [vmem:[#allocation20 + $0x4b0] sm:$0xff]
    %v1503 = vld [vmem:[#allocation20 + $0x4b8] sm:$0xff]
    %v1504 = vld [vmem:[#allocation20 + $0x4c0] sm:$0xff]
    %v1505 = vld [vmem:[#allocation20 + $0x4c8] sm:$0xff]
    %v1506 = vld [vmem:[#allocation20 + $0x4d0] sm:$0xff]
    %v1507 = vld [vmem:[#allocation20 + $0x4d8] sm:$0xff]
    %v1508 = vld [vmem:[#allocation20 + $0x4e0] sm:$0xff]
    %v1509 = vld [vmem:[#allocation20 + $0x4e8] sm:$0xff]
    %v1510 = vld [vmem:[#allocation20 + $0x4f0] sm:$0xff]
    %v1511 = vld [vmem:[#allocation20 + $0x4f8] sm:$0xff]
    %v1512 = vld [vmem:[#allocation20 + $0x500] sm:$0xff]
    %v1513 = vld [vmem:[#allocation20 + $0x508] sm:$0xff]
    %v1514 = vld [vmem:[#allocation20 + $0x510] sm:$0xff]
    %v1515 = vld [vmem:[#allocation20 + $0x518] sm:$0xff]
    %v1516 = vld [vmem:[#allocation20 + $0x520] sm:$0xff]
    %v1517 = vld [vmem:[#allocation20 + $0x528] sm:$0xff]
    %v1518 = vld [vmem:[#allocation20 + $0x530] sm:$0xff]
    %v1519 = vld [vmem:[#allocation20 + $0x538] sm:$0xff]
    %v1520 = vld [vmem:[#allocation20 + $0x540] sm:$0xff]
    %v1521 = vld [vmem:[#allocation20 + $0x548] sm:$0xff]
    %v1522 = vld [vmem:[#allocation20 + $0x550] sm:$0xff]
    %v1523 = vld [vmem:[#allocation20 + $0x558] sm:$0xff]
    %v1524 = vld [vmem:[#allocation20 + $0x560] sm:$0xff]
    %v1525 = vld [vmem:[#allocation20 + $0x568] sm:$0xff]
    %v1526 = vld [vmem:[#allocation20 + $0x570] sm:$0xff]
    %v1527 = vld [vmem:[#allocation20 + $0x578] sm:$0xff]
    %v1528 = vld [vmem:[#allocation20 + $0x580] sm:$0xff]
    %v1529 = vld [vmem:[#allocation20 + $0x588] sm:$0xff]
    %v1530 = vld [vmem:[#allocation20 + $0x590] sm:$0xff]
    %v1531 = vld [vmem:[#allocation20 + $0x598] sm:$0xff]
    %v1532 = vld [vmem:[#allocation20 + $0x5a0] sm:$0xff]
    %v1533 = vld [vmem:[#allocation20 + $0x5a8] sm:$0xff]
    %v1534 = vld [vmem:[#allocation20 + $0x5b0] sm:$0xff]
    %v1535 = vld [vmem:[#allocation20 + $0x5b8] sm:$0xff]
    %v1536 = vld [vmem:[#allocation20 + $0x5c0] sm:$0xff]
    %v1537 = vld [vmem:[#allocation20 + $0x5c8] sm:$0xff]
    %v1538 = vld [vmem:[#allocation20 + $0x5d0] sm:$0xff]
    %v1539 = vld [vmem:[#allocation20 + $0x5d8] sm:$0xff]
    %v1540 = vld [vmem:[#allocation20 + $0x5e0] sm:$0xff]
    %v1541 = vld [vmem:[#allocation20 + $0x5e8] sm:$0xff]
    %v1542 = vld [vmem:[#allocation20 + $0x5f0] sm:$0xff]
    %v1543 = vld [vmem:[#allocation20 + $0x5f8] sm:$0xff]
    %v1544 = vld [vmem:[#allocation20 + $0x600] sm:$0xff]
    %v1545 = vld [vmem:[#allocation20 + $0x608] sm:$0xff]
    %v1546 = vld [vmem:[#allocation20 + $0x610] sm:$0xff]
    %v1547 = vld [vmem:[#allocation20 + $0x618] sm:$0xff]
    %v1548 = vld [vmem:[#allocation20 + $0x620] sm:$0xff]
    %v1549 = vld [vmem:[#allocation20 + $0x628] sm:$0xff]
    %v1550 = vld [vmem:[#allocation20 + $0x630] sm:$0xff]
    %v1551 = vld [vmem:[#allocation20 + $0x638] sm:$0xff]
    %v1552 = vld [vmem:[#allocation20 + $0x640] sm:$0xff]
    %v1553 = vld [vmem:[#allocation20 + $0x648] sm:$0xff]
    %v1554 = vld [vmem:[#allocation20 + $0x650] sm:$0xff]
    %v1555 = vld [vmem:[#allocation20 + $0x658] sm:$0xff]
    %v1556 = vld [vmem:[#allocation20 + $0x660] sm:$0xff]
    %v1557 = vld [vmem:[#allocation20 + $0x668] sm:$0xff]
    %v1558 = vld [vmem:[#allocation20 + $0x670] sm:$0xff]
    %v1559 = vld [vmem:[#allocation20 + $0x678] sm:$0xff]
    %v1560 = vld [vmem:[#allocation20 + $0x680] sm:$0xff]
    %v1561 = vld [vmem:[#allocation20 + $0x688] sm:$0xff]
    %v1562 = vld [vmem:[#allocation20 + $0x690] sm:$0xff]
    %v1563 = vld [vmem:[#allocation20 + $0x698] sm:$0xff]
    %v1564 = vld [vmem:[#allocation20 + $0x6a0] sm:$0xff]
    %v1565 = vld [vmem:[#allocation20 + $0x6a8] sm:$0xff]
    %v1566 = vld [vmem:[#allocation20 + $0x6b0] sm:$0xff]
    %v1567 = vld [vmem:[#allocation20 + $0x6b8] sm:$0xff]
    %v1568 = vld [vmem:[#allocation20 + $0x6c0] sm:$0xff]
    %v1569 = vld [vmem:[#allocation20 + $0x6c8] sm:$0xff]
    %v1570 = vld [vmem:[#allocation20 + $0x6d0] sm:$0xff]
    %v1571 = vld [vmem:[#allocation20 + $0x6d8] sm:$0xff]
    %v1572 = vld [vmem:[#allocation20 + $0x6e0] sm:$0xff]
    %v1573 = vld [vmem:[#allocation20 + $0x6e8] sm:$0xff]
    %v1574 = vld [vmem:[#allocation20 + $0x6f0] sm:$0xff]
    %v1575 = vld [vmem:[#allocation20 + $0x6f8] sm:$0xff]
    %v1576 = vld [vmem:[#allocation20 + $0x700] sm:$0xff]
    %v1577 = vld [vmem:[#allocation20 + $0x708] sm:$0xff]
    %v1578 = vld [vmem:[#allocation20 + $0x710] sm:$0xff]
    %v1579 = vld [vmem:[#allocation20 + $0x718] sm:$0xff]
    %v1580 = vld [vmem:[#allocation20 + $0x720] sm:$0xff]
    %v1581 = vld [vmem:[#allocation20 + $0x728] sm:$0xff]
    %v1582 = vld [vmem:[#allocation20 + $0x730] sm:$0xff]
    %v1583 = vld [vmem:[#allocation20 + $0x738] sm:$0xff]
    %v1584 = vld [vmem:[#allocation20 + $0x740] sm:$0xff]
    %v1585 = vld [vmem:[#allocation20 + $0x748] sm:$0xff]
    %v1586 = vld [vmem:[#allocation20 + $0x750] sm:$0xff]
    %v1587 = vld [vmem:[#allocation20 + $0x758] sm:$0xff]
    %v1588 = vld [vmem:[#allocation20 + $0x760] sm:$0xff]
    %v1589 = vld [vmem:[#allocation20 + $0x768] sm:$0xff]
    %v1590 = vld [vmem:[#allocation20 + $0x770] sm:$0xff]
    %v1591 = vld [vmem:[#allocation20 + $0x778] sm:$0xff]
    %v1592 = vld [vmem:[#allocation20 + $0x780] sm:$0xff]
    %v1593 = vld [vmem:[#allocation20 + $0x788] sm:$0xff]
    %v1594 = vld [vmem:[#allocation20 + $0x790] sm:$0xff]
    %v1595 = vld [vmem:[#allocation20 + $0x798] sm:$0xff]
    %v1596 = vld [vmem:[#allocation20 + $0x7a0] sm:$0xff]
    %v1597 = vld [vmem:[#allocation20 + $0x7a8] sm:$0xff]
    %v1598 = vld [vmem:[#allocation20 + $0x7b0] sm:$0xff]
    %v1599 = vld [vmem:[#allocation20 + $0x7b8] sm:$0xff]
    %v1600 = vld [vmem:[#allocation20 + $0x7c0] sm:$0xff]
    %v1601 = vld [vmem:[#allocation20 + $0x7c8] sm:$0xff]
    %v1602 = vld [vmem:[#allocation20 + $0x7d0] sm:$0xff]
    %v1603 = vld [vmem:[#allocation20 + $0x7d8] sm:$0xff]
    %v1604 = vld [vmem:[#allocation20 + $0x7e0] sm:$0xff]
    %v1605 = vld [vmem:[#allocation20 + $0x7e8] sm:$0xff]
    %v1606 = vld [vmem:[#allocation20 + $0x7f0] sm:$0xff]
    %v1607 = vld [vmem:[#allocation20 + $0x7f8] sm:$0xff]
    %v1608 = vld [vmem:[#allocation20 + $0x800] sm:$0xff]
    %v1609 = vld [vmem:[#allocation20 + $0x808] sm:$0xff]
    %v1610 = vld [vmem:[#allocation20 + $0x810] sm:$0xff]
    %v1611 = vld [vmem:[#allocation20 + $0x818] sm:$0xff]
    %v1612 = vld [vmem:[#allocation20 + $0x820] sm:$0xff]
    %v1613 = vld [vmem:[#allocation20 + $0x828] sm:$0xff]
    %v1614 = vld [vmem:[#allocation20 + $0x830] sm:$0xff]
    %v1615 = vld [vmem:[#allocation20 + $0x838] sm:$0xff]
    %v1616 = vld [vmem:[#allocation20 + $0x840] sm:$0xff]
    %v1617 = vld [vmem:[#allocation20 + $0x848] sm:$0xff]
    %v1618 = vld [vmem:[#allocation20 + $0x850] sm:$0xff]
    %v1619 = vld [vmem:[#allocation20 + $0x858] sm:$0xff]
    %v1620 = vld [vmem:[#allocation20 + $0x860] sm:$0xff]
    %v1621 = vld [vmem:[#allocation20 + $0x868] sm:$0xff]
    %v1622 = vld [vmem:[#allocation20 + $0x870] sm:$0xff]
    %v1623 = vld [vmem:[#allocation20 + $0x878] sm:$0xff]
    %v1624 = vld [vmem:[#allocation20 + $0x880] sm:$0xff]
    %v1625 = vld [vmem:[#allocation20 + $0x888] sm:$0xff]
    %v1626 = vld [vmem:[#allocation20 + $0x890] sm:$0xff]
    %v1627 = vld [vmem:[#allocation20 + $0x898] sm:$0xff]
    %v1628 = vld [vmem:[#allocation20 + $0x8a0] sm:$0xff]
    %v1629 = vld [vmem:[#allocation20 + $0x8a8] sm:$0xff]
    %v1630 = vld [vmem:[#allocation20 + $0x8b0] sm:$0xff]
    %v1631 = vld [vmem:[#allocation20 + $0x8b8] sm:$0xff]
    %v1632 = vld [vmem:[#allocation20 + $0x8c0] sm:$0xff]
    %v1633 = vld [vmem:[#allocation20 + $0x8c8] sm:$0xff]
    %v1634 = vld [vmem:[#allocation20 + $0x8d0] sm:$0xff]
    %v1635 = vld [vmem:[#allocation20 + $0x8d8] sm:$0xff]
    %v1636 = vld [vmem:[#allocation20 + $0x8e0] sm:$0xff]
    %v1637 = vld [vmem:[#allocation20 + $0x8e8] sm:$0xff]
    %v1638 = vld [vmem:[#allocation20 + $0x8f0] sm:$0xff]
    %v1639 = vld [vmem:[#allocation20 + $0x8f8] sm:$0xff]
    %v1640 = vld [vmem:[#allocation20 + $0x900] sm:$0xff]
    %v1641 = vld [vmem:[#allocation20 + $0x908] sm:$0xff]
    %v1642 = vld [vmem:[#allocation20 + $0x910] sm:$0xff]
    %v1643 = vld [vmem:[#allocation20 + $0x918] sm:$0xff]
    %v1644 = vld [vmem:[#allocation20 + $0x920] sm:$0xff]
    %v1645 = vld [vmem:[#allocation20 + $0x928] sm:$0xff]
    %v1646 = vld [vmem:[#allocation20 + $0x930] sm:$0xff]
    %v1647 = vld [vmem:[#allocation20 + $0x938] sm:$0xff]
    %v1648 = vld [vmem:[#allocation20 + $0x940] sm:$0xff]
    %v1649 = vld [vmem:[#allocation20 + $0x948] sm:$0xff]
    %v1650 = vld [vmem:[#allocation20 + $0x950] sm:$0xff]
    %v1651 = vld [vmem:[#allocation20 + $0x958] sm:$0xff]
    %v1652 = vld [vmem:[#allocation20 + $0x960] sm:$0xff]
    %v1653 = vld [vmem:[#allocation20 + $0x968] sm:$0xff]
    %v1654 = vld [vmem:[#allocation20 + $0x970] sm:$0xff]
    %v1655 = vld [vmem:[#allocation20 + $0x978] sm:$0xff]
    %v1656 = vld [vmem:[#allocation20 + $0x980] sm:$0xff]
    %v1657 = vld [vmem:[#allocation20 + $0x988] sm:$0xff]
    %v1658 = vld [vmem:[#allocation20 + $0x990] sm:$0xff]
    %v1659 = vld [vmem:[#allocation20 + $0x998] sm:$0xff]
    %v1660 = vld [vmem:[#allocation20 + $0x9a0] sm:$0xff]
    %v1661 = vld [vmem:[#allocation20 + $0x9a8] sm:$0xff]
    %v1662 = vld [vmem:[#allocation20 + $0x9b0] sm:$0xff]
    %v1663 = vld [vmem:[#allocation20 + $0x9b8] sm:$0xff]
    %v1664 = vld [vmem:[#allocation20 + $0x9c0] sm:$0xff]
    %v1665 = vld [vmem:[#allocation20 + $0x9c8] sm:$0xff]
    %v1666 = vld [vmem:[#allocation20 + $0x9d0] sm:$0xff]
    %v1667 = vld [vmem:[#allocation20 + $0x9d8] sm:$0xff]
    %v1668 = vld [vmem:[#allocation20 + $0x9e0] sm:$0xff]
    %v1669 = vld [vmem:[#allocation20 + $0x9e8] sm:$0xff]
    %v1670 = vld [vmem:[#allocation20 + $0x9f0] sm:$0xff]
    %v1671 = vld [vmem:[#allocation20 + $0x9f8] sm:$0xff]
    %v1672 = vld [vmem:[#allocation2] sm:$0xf]
    %v1673 = vld [vmem:[#allocation22] sm:$0xff]
    %v1674 = vld [vmem:[#allocation22 + $0x8] sm:$0xff]
    %v1675 = vld [vmem:[#allocation22 + $0x10] sm:$0xff]
    %v1676 = vld [vmem:[#allocation22 + $0x18] sm:$0xff]
    %vm1677 = vcmask 130048
    %v1679 = vsel %vm1677, %v1672, 0
    %1681 = vmatprep.subr.mxu0 %v1674
    %1682 = vmatpush1.msra.mxu0 %v1673
    %1683 = vmatprep.subr.mxu0 %v1676
    %1684 = vmatpush1.msra.mxu0 %v1675
    %1685 = vmatprep.subr.mxu0 0.0
    %1686 = vmatpush1.msra.mxu0 0.0
    %1687 = vmatprep.subr.mxu0 0.0
    %1688 = vmatpush1.msra.mxu0 0.0
    %1689 = vmatprep.subr.mxu0 0.0
    %1690 = vmatpush1.msra.mxu0 0.0
    %1691 = vmatprep.subr.mxu0 0.0
    %1692 = vmatpush1.msra.mxu0 0.0
    %1693 = vmatprep.subr.mxu0 0.0
    %1694 = vmatpush1.msra.mxu0 0.0
    %1695 = vmatprep.subr.mxu0 0.0
    %1696 = vmatpush1.msra.mxu0 0.0
    %1697 = vmatprep.subr.mxu0 0.0
    %1698 = vmatpush1.msra.mxu0 0.0
    %1699 = vmatprep.subr.mxu0 0.0
    %1700 = vmatpush1.msra.mxu0 0.0
    %1701 = vmatprep.subr.mxu0 0.0
    %1702 = vmatpush1.msra.mxu0 0.0
    %1703 = vmatprep.subr.mxu0 0.0
    %1704 = vmatpush1.msra.mxu0 0.0
    %1705 = vmatprep.subr.mxu0 0.0
    %1706 = vmatpush1.msra.mxu0 0.0
    %1707 = vmatprep.subr.mxu0 0.0
    %1708 = vmatpush1.msra.mxu0 0.0
    %1709 = vmatprep.subr.mxu0 0.0
    %1710 = vmatpush1.msra.mxu0 0.0
    %1711 = vmatprep.subr.mxu0 0.0
    %1712 = vmatpush1.msra.mxu0 0.0
    %1713 = vmatprep.subr.mxu0 0.0
    %1714 = vmatpush1.msra.mxu0 0.0
    %1715 = vmatprep.subr.mxu0 0.0
    %1716 = vmatpush1.msra.mxu0 0.0
    %1717 = vmatprep.subr.mxu0 0.0
    %1718 = vmatpush1.msra.mxu0 0.0
    %1719 = vmatprep.subr.mxu0 0.0
    %1720 = vmatpush1.msra.mxu0 0.0
    %1721 = vmatprep.subr.mxu0 0.0
    %1722 = vmatpush1.msra.mxu0 0.0
    %1723 = vmatprep.subr.mxu0 0.0
    %1724 = vmatpush1.msra.mxu0 0.0
    %1725 = vmatprep.subr.mxu0 0.0
    %1726 = vmatpush1.msra.mxu0 0.0
    %1727 = vmatprep.subr.mxu0 0.0
    %1728 = vmatpush1.msra.mxu0 0.0
    %1729 = vmatprep.subr.mxu0 0.0
    %1730 = vmatpush1.msra.mxu0 0.0
    %1731 = vmatprep.subr.mxu0 0.0
    %1732 = vmatpush1.msra.mxu0 0.0
    %1733 = vmatprep.subr.mxu0 0.0
    %1734 = vmatpush1.msra.mxu0 0.0
    %1735 = vmatprep.subr.mxu0 0.0
    %1736 = vmatpush1.msra.mxu0 0.0
    %1737 = vmatprep.subr.mxu0 0.0
    %1738 = vmatpush1.msra.mxu0 0.0
    %1739 = vmatprep.subr.mxu0 0.0
    %1740 = vmatpush1.msra.mxu0 0.0
    %1741 = vmatprep.subr.mxu0 0.0
    %1742 = vmatpush1.msra.mxu0 0.0
    %1743 = vmatprep.subr.mxu0 0.0
    %1744 = vmatpush1.msra.mxu0 0.0
    %1745 = vmatprep.mubr.f32.mxu0 0.0
    %1746 = vmatmul.mubr.f32.gmra.mrb[0].mxu0 %v1679
    %v1747 = vpop.f32.mrb[0].mxu0
    %v1748 = vadd.f32 0.0, %v1747
    %v1749 = vpop.f32.mrb[0].mxu0
    %v1750 = vadd.f32 0.0, %v1749
    %1751 = vdwg.mxu0
    %1752 = vmatprep.subr.mxu0 %v1353
    %1753 = vmatpush1.msra.mxu0 %v1352
    %1754 = vmatprep.subr.mxu0 %v1355
    %1755 = vmatpush1.msra.mxu0 %v1354
    %1756 = vmatprep.subr.mxu0 %v1357
    %1757 = vmatpush1.msra.mxu0 %v1356
    %1758 = vmatprep.subr.mxu0 %v1359
    %1759 = vmatpush1.msra.mxu0 %v1358
    %1760 = vmatprep.subr.mxu0 %v1361
    %1761 = vmatpush1.msra.mxu0 %v1360
    %1762 = vmatprep.subr.mxu0 %v1363
    %1763 = vmatpush1.msra.mxu0 %v1362
    %1764 = vmatprep.subr.mxu0 %v1365
    %1765 = vmatpush1.msra.mxu0 %v1364
    %1766 = vmatprep.subr.mxu0 %v1367
    %1767 = vmatpush1.msra.mxu0 %v1366
    %1768 = vmatprep.subr.mxu0 %v1369
    %1769 = vmatpush1.msra.mxu0 %v1368
    %1770 = vmatprep.subr.mxu0 %v1371
    %1771 = vmatpush1.msra.mxu0 %v1370
    %1772 = vmatprep.subr.mxu0 %v1373
    %1773 = vmatpush1.msra.mxu0 %v1372
    %1774 = vmatprep.subr.mxu0 %v1375
    %1775 = vmatpush1.msra.mxu0 %v1374
    %1776 = vmatprep.subr.mxu0 %v1377
    %1777 = vmatpush1.msra.mxu0 %v1376
    %1778 = vmatprep.subr.mxu0 %v1379
    %1779 = vmatpush1.msra.mxu0 %v1378
    %1780 = vmatprep.subr.mxu0 %v1381
    %1781 = vmatpush1.msra.mxu0 %v1380
    %1782 = vmatprep.subr.mxu0 %v1383
    %1783 = vmatpush1.msra.mxu0 %v1382
    %1784 = vmatprep.subr.mxu0 %v1385
    %1785 = vmatpush1.msra.mxu0 %v1384
    %1786 = vmatprep.subr.mxu0 %v1387
    %1787 = vmatpush1.msra.mxu0 %v1386
    %1788 = vmatprep.subr.mxu0 %v1389
    %1789 = vmatpush1.msra.mxu0 %v1388
    %1790 = vmatprep.subr.mxu0 %v1391
    %1791 = vmatpush1.msra.mxu0 %v1390
    %1792 = vmatprep.subr.mxu0 %v1393
    %1793 = vmatpush1.msra.mxu0 %v1392
    %1794 = vmatprep.subr.mxu0 %v1395
    %1795 = vmatpush1.msra.mxu0 %v1394
    %1796 = vmatprep.subr.mxu0 %v1397
    %1797 = vmatpush1.msra.mxu0 %v1396
    %1798 = vmatprep.subr.mxu0 %v1399
    %1799 = vmatpush1.msra.mxu0 %v1398
    %1800 = vmatprep.subr.mxu0 %v1401
    %1801 = vmatpush1.msra.mxu0 %v1400
    %1802 = vmatprep.subr.mxu0 %v1403
    %1803 = vmatpush1.msra.mxu0 %v1402
    %1804 = vmatprep.subr.mxu0 %v1405
    %1805 = vmatpush1.msra.mxu0 %v1404
    %1806 = vmatprep.subr.mxu0 %v1407
    %1807 = vmatpush1.msra.mxu0 %v1406
    %1808 = vmatprep.subr.mxu0 %v1409
    %1809 = vmatpush1.msra.mxu0 %v1408
    %1810 = vmatprep.subr.mxu0 %v1411
    %1811 = vmatpush1.msra.mxu0 %v1410
    %1812 = vmatprep.subr.mxu0 %v1413
    %1813 = vmatpush1.msra.mxu0 %v1412
    %1814 = vmatprep.subr.mxu0 %v1415
    %1815 = vmatpush1.msra.mxu0 %v1414
    %1816 = vmatprep.mubr.f32.mxu0 %v1335
    %1817 = vmatmul.mubr.f32.gmra.mrb[0].mxu0 %v1334
    %v1818 = vpop.f32.mrb[0].mxu0
    %v1819 = vadd.f32 %v1748, %v1818
    %v1820 = vpop.f32.mrb[0].mxu0
    %v1821 = vadd.f32 %v1750, %v1820
    %1822 = vdwg.mxu0
    %1823 = vmatprep.subr.mxu0 %v1417
    %1824 = vmatpush1.msra.mxu0 %v1416
    %1825 = vmatprep.subr.mxu0 %v1419
    %1826 = vmatpush1.msra.mxu0 %v1418
    %1827 = vmatprep.subr.mxu0 %v1421
    %1828 = vmatpush1.msra.mxu0 %v1420
    %1829 = vmatprep.subr.mxu0 %v1423
    %1830 = vmatpush1.msra.mxu0 %v1422
    %1831 = vmatprep.subr.mxu0 %v1425
    %1832 = vmatpush1.msra.mxu0 %v1424
    %1833 = vmatprep.subr.mxu0 %v1427
    %1834 = vmatpush1.msra.mxu0 %v1426
    %1835 = vmatprep.subr.mxu0 %v1429
    %1836 = vmatpush1.msra.mxu0 %v1428
    %1837 = vmatprep.subr.mxu0 %v1431
    %1838 = vmatpush1.msra.mxu0 %v1430
    %1839 = vmatprep.subr.mxu0 %v1433
    %1840 = vmatpush1.msra.mxu0 %v1432
    %1841 = vmatprep.subr.mxu0 %v1435
    %1842 = vmatpush1.msra.mxu0 %v1434
    %1843 = vmatprep.subr.mxu0 %v1437
    %1844 = vmatpush1.msra.mxu0 %v1436
    %1845 = vmatprep.subr.mxu0 %v1439
    %1846 = vmatpush1.msra.mxu0 %v1438
    %1847 = vmatprep.subr.mxu0 %v1441
    %1848 = vmatpush1.msra.mxu0 %v1440
    %1849 = vmatprep.subr.mxu0 %v1443
    %1850 = vmatpush1.msra.mxu0 %v1442
    %1851 = vmatprep.subr.mxu0 %v1445
    %1852 = vmatpush1.msra.mxu0 %v1444
    %1853 = vmatprep.subr.mxu0 %v1447
    %1854 = vmatpush1.msra.mxu0 %v1446
    %1855 = vmatprep.subr.mxu0 %v1449
    %1856 = vmatpush1.msra.mxu0 %v1448
    %1857 = vmatprep.subr.mxu0 %v1451
    %1858 = vmatpush1.msra.mxu0 %v1450
    %1859 = vmatprep.subr.mxu0 %v1453
    %1860 = vmatpush1.msra.mxu0 %v1452
    %1861 = vmatprep.subr.mxu0 %v1455
    %1862 = vmatpush1.msra.mxu0 %v1454
    %1863 = vmatprep.subr.mxu0 %v1457
    %1864 = vmatpush1.msra.mxu0 %v1456
    %1865 = vmatprep.subr.mxu0 %v1459
    %1866 = vmatpush1.msra.mxu0 %v1458
    %1867 = vmatprep.subr.mxu0 %v1461
    %1868 = vmatpush1.msra.mxu0 %v1460
    %1869 = vmatprep.subr.mxu0 %v1463
    %1870 = vmatpush1.msra.mxu0 %v1462
    %1871 = vmatprep.subr.mxu0 %v1465
    %1872 = vmatpush1.msra.mxu0 %v1464
    %1873 = vmatprep.subr.mxu0 %v1467
    %1874 = vmatpush1.msra.mxu0 %v1466
    %1875 = vmatprep.subr.mxu0 %v1469
    %1876 = vmatpush1.msra.mxu0 %v1468
    %1877 = vmatprep.subr.mxu0 %v1471
    %1878 = vmatpush1.msra.mxu0 %v1470
    %1879 = vmatprep.subr.mxu0 %v1473
    %1880 = vmatpush1.msra.mxu0 %v1472
    %1881 = vmatprep.subr.mxu0 %v1475
    %1882 = vmatpush1.msra.mxu0 %v1474
    %1883 = vmatprep.subr.mxu0 %v1477
    %1884 = vmatpush1.msra.mxu0 %v1476
    %1885 = vmatprep.subr.mxu0 %v1479
    %1886 = vmatpush1.msra.mxu0 %v1478
    %1887 = vmatprep.mubr.f32.mxu0 %v1343
    %1888 = vmatmul.mubr.f32.gmra.mrb[0].mxu0 %v1342
    %v1889 = vpop.f32.mrb[0].mxu0
    %v1890 = vadd.f32 %v1819, %v1889
    %v1891 = vpop.f32.mrb[0].mxu0
    %v1892 = vadd.f32 %v1821, %v1891
    %1893 = vdwg.mxu0
    %1894 = vmatprep.subr.mxu0 %v1481
    %1895 = vmatpush1.msra.mxu0 %v1480
    %1896 = vmatprep.subr.mxu0 %v1483
    %1897 = vmatpush1.msra.mxu0 %v1482
    %1898 = vmatprep.subr.mxu0 %v1485
    %1899 = vmatpush1.msra.mxu0 %v1484
    %1900 = vmatprep.subr.mxu0 %v1487
    %1901 = vmatpush1.msra.mxu0 %v1486
    %1902 = vmatprep.subr.mxu0 %v1489
    %1903 = vmatpush1.msra.mxu0 %v1488
    %1904 = vmatprep.subr.mxu0 %v1491
    %1905 = vmatpush1.msra.mxu0 %v1490
    %1906 = vmatprep.subr.mxu0 %v1493
    %1907 = vmatpush1.msra.mxu0 %v1492
    %1908 = vmatprep.subr.mxu0 %v1495
    %1909 = vmatpush1.msra.mxu0 %v1494
    %1910 = vmatprep.subr.mxu0 %v1497
    %1911 = vmatpush1.msra.mxu0 %v1496
    %1912 = vmatprep.subr.mxu0 %v1499
    %1913 = vmatpush1.msra.mxu0 %v1498
    %1914 = vmatprep.subr.mxu0 %v1501
    %1915 = vmatpush1.msra.mxu0 %v1500
    %1916 = vmatprep.subr.mxu0 %v1503
    %1917 = vmatpush1.msra.mxu0 %v1502
    %1918 = vmatprep.subr.mxu0 %v1505
    %1919 = vmatpush1.msra.mxu0 %v1504
    %1920 = vmatprep.subr.mxu0 %v1507
    %1921 = vmatpush1.msra.mxu0 %v1506
    %1922 = vmatprep.subr.mxu0 %v1509
    %1923 = vmatpush1.msra.mxu0 %v1508
    %1924 = vmatprep.subr.mxu0 %v1511
    %1925 = vmatpush1.msra.mxu0 %v1510
    %1926 = vmatprep.subr.mxu0 %v1513
    %1927 = vmatpush1.msra.mxu0 %v1512
    %1928 = vmatprep.subr.mxu0 %v1515
    %1929 = vmatpush1.msra.mxu0 %v1514
    %1930 = vmatprep.subr.mxu0 %v1517
    %1931 = vmatpush1.msra.mxu0 %v1516
    %1932 = vmatprep.subr.mxu0 %v1519
    %1933 = vmatpush1.msra.mxu0 %v1518
    %1934 = vmatprep.subr.mxu0 %v1521
    %1935 = vmatpush1.msra.mxu0 %v1520
    %1936 = vmatprep.subr.mxu0 %v1523
    %1937 = vmatpush1.msra.mxu0 %v1522
    %1938 = vmatprep.subr.mxu0 %v1525
    %1939 = vmatpush1.msra.mxu0 %v1524
    %1940 = vmatprep.subr.mxu0 %v1527
    %1941 = vmatpush1.msra.mxu0 %v1526
    %1942 = vmatprep.subr.mxu0 %v1529
    %1943 = vmatpush1.msra.mxu0 %v1528
    %1944 = vmatprep.subr.mxu0 %v1531
    %1945 = vmatpush1.msra.mxu0 %v1530
    %1946 = vmatprep.subr.mxu0 %v1533
    %1947 = vmatpush1.msra.mxu0 %v1532
    %1948 = vmatprep.subr.mxu0 %v1535
    %1949 = vmatpush1.msra.mxu0 %v1534
    %1950 = vmatprep.subr.mxu0 %v1537
    %1951 = vmatpush1.msra.mxu0 %v1536
    %1952 = vmatprep.subr.mxu0 %v1539
    %1953 = vmatpush1.msra.mxu0 %v1538
    %1954 = vmatprep.subr.mxu0 %v1541
    %1955 = vmatpush1.msra.mxu0 %v1540
    %1956 = vmatprep.subr.mxu0 %v1543
    %1957 = vmatpush1.msra.mxu0 %v1542
    %1958 = vmatprep.mubr.f32.mxu0 %v1337
    %1959 = vmatmul.mubr.f32.gmra.mrb[0].mxu0 %v1336
    %v1960 = vpop.f32.mrb[0].mxu0
    %v1961 = vadd.f32 %v1890, %v1960
    %v1962 = vpop.f32.mrb[0].mxu0
    %v1963 = vadd.f32 %v1892, %v1962
    %1964 = vdwg.mxu0
    %1965 = vmatprep.subr.mxu0 %v1545
    %1966 = vmatpush1.msra.mxu0 %v1544
    %1967 = vmatprep.subr.mxu0 %v1547
    %1968 = vmatpush1.msra.mxu0 %v1546
    %1969 = vmatprep.subr.mxu0 %v1549
    %1970 = vmatpush1.msra.mxu0 %v1548
    %1971 = vmatprep.subr.mxu0 %v1551
    %1972 = vmatpush1.msra.mxu0 %v1550
    %1973 = vmatprep.subr.mxu0 %v1553
    %1974 = vmatpush1.msra.mxu0 %v1552
    %1975 = vmatprep.subr.mxu0 %v1555
    %1976 = vmatpush1.msra.mxu0 %v1554
    %1977 = vmatprep.subr.mxu0 %v1557
    %1978 = vmatpush1.msra.mxu0 %v1556
    %1979 = vmatprep.subr.mxu0 %v1559
    %1980 = vmatpush1.msra.mxu0 %v1558
    %1981 = vmatprep.subr.mxu0 %v1561
    %1982 = vmatpush1.msra.mxu0 %v1560
    %1983 = vmatprep.subr.mxu0 %v1563
    %1984 = vmatpush1.msra.mxu0 %v1562
    %1985 = vmatprep.subr.mxu0 %v1565
    %1986 = vmatpush1.msra.mxu0 %v1564
    %1987 = vmatprep.subr.mxu0 %v1567
    %1988 = vmatpush1.msra.mxu0 %v1566
    %1989 = vmatprep.subr.mxu0 %v1569
    %1990 = vmatpush1.msra.mxu0 %v1568
    %1991 = vmatprep.subr.mxu0 %v1571
    %1992 = vmatpush1.msra.mxu0 %v1570
    %1993 = vmatprep.subr.mxu0 %v1573
    %1994 = vmatpush1.msra.mxu0 %v1572
    %1995 = vmatprep.subr.mxu0 %v1575
    %1996 = vmatpush1.msra.mxu0 %v1574
    %1997 = vmatprep.subr.mxu0 %v1577
    %1998 = vmatpush1.msra.mxu0 %v1576
    %1999 = vmatprep.subr.mxu0 %v1579
    %2000 = vmatpush1.msra.mxu0 %v1578
    %2001 = vmatprep.subr.mxu0 %v1581
    %2002 = vmatpush1.msra.mxu0 %v1580
    %2003 = vmatprep.subr.mxu0 %v1583
    %2004 = vmatpush1.msra.mxu0 %v1582
    %2005 = vmatprep.subr.mxu0 %v1585
    %2006 = vmatpush1.msra.mxu0 %v1584
    %2007 = vmatprep.subr.mxu0 %v1587
    %2008 = vmatpush1.msra.mxu0 %v1586
    %2009 = vmatprep.subr.mxu0 %v1589
    %2010 = vmatpush1.msra.mxu0 %v1588
    %2011 = vmatprep.subr.mxu0 %v1591
    %2012 = vmatpush1.msra.mxu0 %v1590
    %2013 = vmatprep.subr.mxu0 %v1593
    %2014 = vmatpush1.msra.mxu0 %v1592
    %2015 = vmatprep.subr.mxu0 %v1595
    %2016 = vmatpush1.msra.mxu0 %v1594
    %2017 = vmatprep.subr.mxu0 %v1597
    %2018 = vmatpush1.msra.mxu0 %v1596
    %2019 = vmatprep.subr.mxu0 %v1599
    %2020 = vmatpush1.msra.mxu0 %v1598
    %2021 = vmatprep.subr.mxu0 %v1601
    %2022 = vmatpush1.msra.mxu0 %v1600
    %2023 = vmatprep.subr.mxu0 %v1603
    %2024 = vmatpush1.msra.mxu0 %v1602
    %2025 = vmatprep.subr.mxu0 %v1605
    %2026 = vmatpush1.msra.mxu0 %v1604
    %2027 = vmatprep.subr.mxu0 %v1607
    %2028 = vmatpush1.msra.mxu0 %v1606
    %2029 = vmatprep.mubr.f32.mxu0 %v1349
    %2030 = vmatmul.mubr.f32.gmra.mrb[0].mxu0 %v1348
    %v2031 = vpop.f32.mrb[0].mxu0
    %v2032 = vadd.f32 %v1961, %v2031
    %v2033 = vpop.f32.mrb[0].mxu0
    %v2034 = vadd.f32 %v1963, %v2033
    %2035 = vdwg.mxu0
    %2036 = vmatprep.subr.mxu0 %v1609
    %2037 = vmatpush1.msra.mxu0 %v1608
    %2038 = vmatprep.subr.mxu0 %v1611
    %2039 = vmatpush1.msra.mxu0 %v1610
    %2040 = vmatprep.subr.mxu0 %v1613
    %2041 = vmatpush1.msra.mxu0 %v1612
    %2042 = vmatprep.subr.mxu0 %v1615
    %2043 = vmatpush1.msra.mxu0 %v1614
    %2044 = vmatprep.subr.mxu0 %v1617
    %2045 = vmatpush1.msra.mxu0 %v1616
    %2046 = vmatprep.subr.mxu0 %v1619
    %2047 = vmatpush1.msra.mxu0 %v1618
    %2048 = vmatprep.subr.mxu0 %v1621
    %2049 = vmatpush1.msra.mxu0 %v1620
    %2050 = vmatprep.subr.mxu0 %v1623
    %2051 = vmatpush1.msra.mxu0 %v1622
    %2052 = vmatprep.subr.mxu0 %v1625
    %2053 = vmatpush1.msra.mxu0 %v1624
    %2054 = vmatprep.subr.mxu0 %v1627
    %2055 = vmatpush1.msra.mxu0 %v1626
    %2056 = vmatprep.subr.mxu0 %v1629
    %2057 = vmatpush1.msra.mxu0 %v1628
    %2058 = vmatprep.subr.mxu0 %v1631
    %2059 = vmatpush1.msra.mxu0 %v1630
    %2060 = vmatprep.subr.mxu0 %v1633
    %2061 = vmatpush1.msra.mxu0 %v1632
    %2062 = vmatprep.subr.mxu0 %v1635
    %2063 = vmatpush1.msra.mxu0 %v1634
    %2064 = vmatprep.subr.mxu0 %v1637
    %2065 = vmatpush1.msra.mxu0 %v1636
    %2066 = vmatprep.subr.mxu0 %v1639
    %2067 = vmatpush1.msra.mxu0 %v1638
    %2068 = vmatprep.subr.mxu0 %v1641
    %2069 = vmatpush1.msra.mxu0 %v1640
    %2070 = vmatprep.subr.mxu0 %v1643
    %2071 = vmatpush1.msra.mxu0 %v1642
    %2072 = vmatprep.subr.mxu0 %v1645
    %2073 = vmatpush1.msra.mxu0 %v1644
    %2074 = vmatprep.subr.mxu0 %v1647
    %2075 = vmatpush1.msra.mxu0 %v1646
    %2076 = vmatprep.subr.mxu0 %v1649
    %2077 = vmatpush1.msra.mxu0 %v1648
    %2078 = vmatprep.subr.mxu0 %v1651
    %2079 = vmatpush1.msra.mxu0 %v1650
    %2080 = vmatprep.subr.mxu0 %v1653
    %2081 = vmatpush1.msra.mxu0 %v1652
    %2082 = vmatprep.subr.mxu0 %v1655
    %2083 = vmatpush1.msra.mxu0 %v1654
    %2084 = vmatprep.subr.mxu0 %v1657
    %2085 = vmatpush1.msra.mxu0 %v1656
    %2086 = vmatprep.subr.mxu0 %v1659
    %2087 = vmatpush1.msra.mxu0 %v1658
    %2088 = vmatprep.subr.mxu0 %v1661
    %2089 = vmatpush1.msra.mxu0 %v1660
    %2090 = vmatprep.subr.mxu0 %v1663
    %2091 = vmatpush1.msra.mxu0 %v1662
    %2092 = vmatprep.subr.mxu0 %v1665
    %2093 = vmatpush1.msra.mxu0 %v1664
    %2094 = vmatprep.subr.mxu0 %v1667
    %2095 = vmatpush1.msra.mxu0 %v1666
    %2096 = vmatprep.subr.mxu0 %v1669
    %2097 = vmatpush1.msra.mxu0 %v1668
    %2098 = vmatprep.subr.mxu0 %v1671
    %2099 = vmatpush1.msra.mxu0 %v1670
    %2100 = vmatprep.mubr.f32.mxu0 %v1339
    %2101 = vmatmul.mubr.f32.gmra.mrb[0].mxu0 %v1338
    %v2102 = vpop.f32.mrb[0].mxu0
    %v2103 = vadd.f32 %v2032, %v2102
    %v2104 = vpop.f32.mrb[0].mxu0
    %v2105 = vadd.f32 %v2034, %v2104
    %2106 = vdwg.mxu0
    %v2107 = vld [vmem:[#allocation23] sm:$0x3]
    %v2109 = vlaneseq
    %v2110 = vshrl.u32 %v2109, 7
    %v2111 = vsub.s32 0, %v2110
    %v2112 = vrot.slane %v2107, %v2111
    %v2113 = vlaneseq
    %v2114 = vshrl.u32 %v2113, 7
    %v2115 = vsub.s32 1, %v2114
    %v2116 = vrot.slane %v2107, %v2115
    %v2119 = vadd.f32 %v2103, %v2112
    %v2120 = vadd.f32 %v2105, %v2116
    %v2121 = vmax.f32 %v2119, 0.0
    %v2122 = vmax.f32 %v2120, 0.0
    %v2123 = vld [vmem:[%s15] sm:$0xff]
    %v2124 = vld [vmem:[%s15 + $0x8] sm:$0xff]
    %v2125 = vld [vmem:[%s15 + $0x10] sm:$0xff]
    %v2126 = vld [vmem:[%s15 + $0x18] sm:$0xff]
    %v2127 = vld [vmem:[%s15 + $0x20] sm:$0xff]
    %v2128 = vld [vmem:[%s15 + $0x28] sm:$0xff]
    %v2129 = vld [vmem:[%s15 + $0x30] sm:$0xff]
    %v2130 = vld [vmem:[%s15 + $0x38] sm:$0xff]
    %v2131 = vld [vmem:[%s15 + $0x40] sm:$0xff]
    %v2132 = vld [vmem:[%s15 + $0x48] sm:$0xff]
    %v2133 = vld [vmem:[%s15 + $0x50] sm:$0xff]
    %v2134 = vld [vmem:[%s15 + $0x58] sm:$0xff]
    %v2135 = vld [vmem:[%s15 + $0x60] sm:$0xff]
    %v2136 = vld [vmem:[%s15 + $0x68] sm:$0xff]
    %v2137 = vld [vmem:[%s15 + $0x70] sm:$0xff]
    %v2138 = vld [vmem:[%s15 + $0x78] sm:$0xff]
    %v2139 = vld [vmem:[%s15 + $0x80] sm:$0xff]
    %v2140 = vld [vmem:[%s15 + $0x88] sm:$0xff]
    %v2141 = vld [vmem:[%s15 + $0x90] sm:$0xff]
    %v2142 = vld [vmem:[%s15 + $0x98] sm:$0xff]
    %v2143 = vld [vmem:[%s15 + $0xa0] sm:$0xff]
    %v2144 = vld [vmem:[%s15 + $0xa8] sm:$0xff]
    %v2145 = vld [vmem:[%s15 + $0xb0] sm:$0xff]
    %v2146 = vld [vmem:[%s15 + $0xb8] sm:$0xff]
    %v2147 = vld [vmem:[%s15 + $0xc0] sm:$0xff]
    %v2148 = vld [vmem:[%s15 + $0xc8] sm:$0xff]
    %v2149 = vld [vmem:[%s15 + $0xd0] sm:$0xff]
    %v2150 = vld [vmem:[%s15 + $0xd8] sm:$0xff]
    %v2151 = vld [vmem:[%s15 + $0xe0] sm:$0xff]
    %v2152 = vld [vmem:[%s15 + $0xe8] sm:$0xff]
    %v2153 = vld [vmem:[%s15 + $0xf0] sm:$0xff]
    %v2154 = vld [vmem:[%s15 + $0xf8] sm:$0xff]
    %v2155 = vld [vmem:[#allocation25] sm:$0x1]
    %v2157 = vlaneseq
    %v2158 = vshrl.u32 %v2157, 7
    %v2159 = vsub.s32 0, %v2158
    %v2160 = vrot.slane %v2155, %v2159
    %2162 = vmatprep.subr.mxu0 0.0
    %2163 = vmatpush1.msra.mxu0 %v2123
    %2164 = vmatprep.subr.mxu0 0.0
    %2165 = vmatpush1.msra.mxu0 %v2124
    %2166 = vmatprep.subr.mxu0 0.0
    %2167 = vmatpush1.msra.mxu0 %v2125
    %2168 = vmatprep.subr.mxu0 0.0
    %2169 = vmatpush1.msra.mxu0 %v2126
    %2170 = vmatprep.subr.mxu0 0.0
    %2171 = vmatpush1.msra.mxu0 %v2127
    %2172 = vmatprep.subr.mxu0 0.0
    %2173 = vmatpush1.msra.mxu0 %v2128
    %2174 = vmatprep.subr.mxu0 0.0
    %2175 = vmatpush1.msra.mxu0 %v2129
    %2176 = vmatprep.subr.mxu0 0.0
    %2177 = vmatpush1.msra.mxu0 %v2130
    %2178 = vmatprep.subr.mxu0 0.0
    %2179 = vmatpush1.msra.mxu0 %v2131
    %2180 = vmatprep.subr.mxu0 0.0
    %2181 = vmatpush1.msra.mxu0 %v2132
    %2182 = vmatprep.subr.mxu0 0.0
    %2183 = vmatpush1.msra.mxu0 %v2133
    %2184 = vmatprep.subr.mxu0 0.0
    %2185 = vmatpush1.msra.mxu0 %v2134
    %2186 = vmatprep.subr.mxu0 0.0
    %2187 = vmatpush1.msra.mxu0 %v2135
    %2188 = vmatprep.subr.mxu0 0.0
    %2189 = vmatpush1.msra.mxu0 %v2136
    %2190 = vmatprep.subr.mxu0 0.0
    %2191 = vmatpush1.msra.mxu0 %v2137
    %2192 = vmatprep.subr.mxu0 0.0
    %2193 = vmatpush1.msra.mxu0 %v2138
    %2194 = vmatprep.subr.mxu0 0.0
    %2195 = vmatpush1.msra.mxu0 %v2139
    %2196 = vmatprep.subr.mxu0 0.0
    %2197 = vmatpush1.msra.mxu0 %v2140
    %2198 = vmatprep.subr.mxu0 0.0
    %2199 = vmatpush1.msra.mxu0 %v2141
    %2200 = vmatprep.subr.mxu0 0.0
    %2201 = vmatpush1.msra.mxu0 %v2142
    %2202 = vmatprep.subr.mxu0 0.0
    %2203 = vmatpush1.msra.mxu0 %v2143
    %2204 = vmatprep.subr.mxu0 0.0
    %2205 = vmatpush1.msra.mxu0 %v2144
    %2206 = vmatprep.subr.mxu0 0.0
    %2207 = vmatpush1.msra.mxu0 %v2145
    %2208 = vmatprep.subr.mxu0 0.0
    %2209 = vmatpush1.msra.mxu0 %v2146
    %2210 = vmatprep.subr.mxu0 0.0
    %2211 = vmatpush1.msra.mxu0 %v2147
    %2212 = vmatprep.subr.mxu0 0.0
    %2213 = vmatpush1.msra.mxu0 %v2148
    %2214 = vmatprep.subr.mxu0 0.0
    %2215 = vmatpush1.msra.mxu0 %v2149
    %2216 = vmatprep.subr.mxu0 0.0
    %2217 = vmatpush1.msra.mxu0 %v2150
    %2218 = vmatprep.subr.mxu0 0.0
    %2219 = vmatpush1.msra.mxu0 %v2151
    %2220 = vmatprep.subr.mxu0 0.0
    %2221 = vmatpush1.msra.mxu0 %v2152
    %2222 = vmatprep.subr.mxu0 0.0
    %2223 = vmatpush1.msra.mxu0 %v2153
    %2224 = vmatprep.subr.mxu0 0.0
    %2225 = vmatpush1.msra.mxu0 %v2154
    %2226 = vmatprep.mubr.f32.mxu0 %v2122
    %2227 = vmatmul.mubr.f32.gmra.mrb[0].mxu0 %v2121
    %v2228 = vpop.f32.mrb[0].mxu0
    %v2229 = vadd.f32 %v2160, %v2228
    %v2230 = vpop.f32.mrb[0].mxu0
    %2231 = vdwg.mxu0
    %vm2232 = vcmask 52224
    %2233 = vst.msk [vmem:[#allocation26] sm:$0xf] %vm2232, %v2229
    // Predicated region
    $region130: #{minigrid_crm_dqn_forward.1} parent=1 // pred_check
      _
    $region131: #{minigrid_crm_dqn_forward.1} parent=1 // pred_check_branch
      %2235 = sbr.rel (0) target = $region133
    $region132: #{minigrid_crm_dqn_forward.1} parent=1 // pred_region
      %s2237 = ssub.s32 64, 64
      %2238 = vsyncadd [#allocation4], %s2237
      %s2240 = sshll.u32 [#allocation26], 4
      %s2241 = int_to_ptr.vmem [resolvable:$true] %s2240
      %2243 = dma.vmem_to_hbm [thread:$0]  %s2241, 64, %s17, [#allocation4]
    $region133: #{minigrid_crm_dqn_forward.1} parent=1 // pred_fallthru
      _
    // Predicated region
    $region134: #{minigrid_crm_dqn_forward.1} parent=1 // pred_check
      _
    $region135: #{minigrid_crm_dqn_forward.1} parent=1 // pred_check_branch
      %2245 = sbr.rel (0) target = $region137
    $region136: #{minigrid_crm_dqn_forward.1} parent=1 // pred_region
      %2246 = dma.done [#allocation4], 64
    $region137: #{minigrid_crm_dqn_forward.1} parent=1 // pred_fallthru
      _
    %2247 = vsyncpa [#allocation3], 1
    %2248 = vsyncpa [#allocation6], 1
    %2249 = vsyncpa [#allocation9], 1
    %2250 = vsyncpa [#allocation12], 1
    %2251 = vsyncpa [#allocation15], 1
    %2252 = vsyncpa [#allocation18], 1
    %2253 = vsyncpa [#allocation21], 1
    %2254 = vsyncpa [#allocation24], 1
    %2255 = vsyncpa [#allocation4], 1

</llo_original>
